<compile_context>
chip_gen: v7x
topology: tpu7x:2x2x1
jax: 0.10.0
libtpu: 0.0.40
codegen_flags: <defaults>
</compile_context>

<pallas_src>
import functools

import jax
import jax.numpy as jnp
from jax import lax
from jax.experimental import pallas as pl
from jax.experimental.pallas import tpu as pltpu

NUM_BINS = 4  # args.pod_num_bins


def _pod_kernel(x_ref, o_ref, *, num_bins, C, P, P_pad, TP, n_chunks):
    # x_ref block: (6, BB, P_pad)  -- rows [x, y, z, ox, oy, oz]; points on lanes.
    # o_ref block: (BB, C, 10)     -- per-cell [freq, mean(3), cov(6)].
    f32 = jnp.float32

    # ---- Stage 1: per-batch cube bounds over the full point block ----------
    px = x_ref[0]                                              # (BB, P_pad)
    py = x_ref[1]
    pz = x_ref[2]
    absmax = jnp.maximum(jnp.abs(px), jnp.maximum(jnp.abs(py), jnp.abs(pz)))
    bbox_max = jnp.max(absmax, axis=1, keepdims=True)          # (BB, 1)
    thickness = jnp.maximum(2.0 * bbox_max, 1e-5)
    inv_thick = 1.0 / thickness                                # (BB, 1)
    inv_nb = f32(1.0 / num_bins)

    # Small iota for the one-hot compare; broadcast happens at compare time.
    iota_c = lax.broadcasted_iota(jnp.int32, (1, C, 1), 1)

    # Accumulate per-cell sums directly in the VMEM-resident output block.
    o_ref[...] = jnp.zeros_like(o_ref)

    # ---- Stage 2: chunked scatter-add over cells (one-hot matmul) ----------
    @pl.loop(0, n_chunks)
    def _(t):
        off = pl.multiple_of(t * TP, TP)
        sl = pl.ds(off, TP)
        cpx = x_ref[0, :, sl]                                  # (BB, TP)
        cpy = x_ref[1, :, sl]
        cpz = x_ref[2, :, sl]
        cox = x_ref[3, :, sl]
        coy = x_ref[4, :, sl]
        coz = x_ref[5, :, sl]

        # Position in unit cube, per-axis bin index, distance to cell center.
        pic_x = (cpx + bbox_max) * inv_thick
        pic_y = (cpy + bbox_max) * inv_thick
        pic_z = (cpz + bbox_max) * inv_thick
        cix = jnp.clip((pic_x * num_bins).astype(jnp.int32), 0, num_bins - 1)
        ciy = jnp.clip((pic_y * num_bins).astype(jnp.int32), 0, num_bins - 1)
        ciz = jnp.clip((pic_z * num_bins).astype(jnp.int32), 0, num_bins - 1)
        cell = (cix * num_bins + ciy) * num_bins + ciz          # (BB, TP) int32
        cen_x = pic_x - (cix.astype(f32) + 0.5) * inv_nb        # == pic - grids[cell]
        cen_y = pic_y - (ciy.astype(f32) + 0.5) * inv_nb
        cen_z = pic_z - (ciz.astype(f32) + 0.5) * inv_nb

        if P != P_pad:
            # Route padded points to an out-of-range cell id: their one-hot row
            # is identically zero, so they contribute nothing to any sum.
            lane = lax.broadcasted_iota(jnp.int32, cell.shape, 1)
            cell = jnp.where(lane + off < P, cell, C)

        ones = jnp.ones_like(cpx)
        feats = jnp.stack(
            [ones, cen_x, cen_y, cen_z,
             cox * cox, cox * coy, cox * coz,
             coy * coy, coy * coz, coz * coz],
            axis=1)                                             # (BB, 10, TP)

        onehot = (cell[:, None, :] == iota_c).astype(f32)       # (BB, C, TP)

        # Scatter-add over cells as a batched matmul on the MXU.  The wide
        # one-hot is the K-on-lanes streamed operand; only the small (10, TP)
        # feats slab needs the relayout to (TP, 10).
        o_ref[...] += jnp.einsum('bcp,bfp->bcf', onehot, feats,
                                 preferred_element_type=f32)    # (BB, C, 10)

    # ---- Stage 3: per-cell normalization + global L2 normalize -------------
    agg = o_ref[...]                                            # (BB, C, 10)
    freq = agg[:, :, 0:1]                                       # (BB, C, 1)
    freq_c = jnp.maximum(freq, 1.0)
    uprefix = 1.0 / jnp.sqrt(freq_c)
    f_freq = 0.001 * freq * uprefix
    f_mean = agg[:, :, 1:4] * uprefix
    f_cov = agg[:, :, 4:10] / freq_c
    f_all = jnp.concatenate([f_freq, f_mean, f_cov], axis=-1)   # (BB, C, 10)

    # F.normalize over the flattened per-batch row (eps = 1e-12).
    ssq = jnp.sum(f_all * f_all, axis=2, keepdims=True)
    ssq = jnp.sum(ssq, axis=1, keepdims=True)                   # (BB, 1, 1)
    inv_norm = 1.0 / jnp.maximum(jnp.sqrt(ssq), 1e-12)
    o_ref[...] = f_all * inv_norm


def _choose_bb(B, P_pad, batch_block):
    """Batch sub-block: multiple of 8 (or == B), <=~4 MiB input block,
    and >= 2 grid steps when B > 8 so both v7x TensorCores get work."""
    if B <= 8:
        return B
    cap = max(8, (4 << 20) // (6 * P_pad * 4))
    bb = max(8, min(batch_block, cap))
    bb = (bb // 8) * 8
    half8 = (((B + 1) // 2 + 7) // 8) * 8
    return max(8, min(bb, half8))


def handcrafted_pod_extractor(x, num_bins=NUM_BINS, batch_block=32):
    """x: (B, P, >=6) float -> (B, num_bins^3 * 10) float32."""
    B, P, D = x.shape
    assert D >= 6
    C = num_bins * num_bins * num_bins

    # Point chunking: TP is a multiple of 128, TP * n_chunks = P_pad >= P.
    P128 = ((P + 127) // 128) * 128
    n_chunks = max(1, -(-P128 // 512))
    TP = ((-(-P128 // n_chunks) + 127) // 128) * 128
    P_pad = TP * n_chunks

    BB = _choose_bb(B, P_pad, batch_block)
    n_steps = -(-B // BB)
    B_pad = n_steps * BB

    # NOTE: slice + cast + transpose + pad below is one extra HBM pass outside
    # the kernel; a producer emitting (6, B, P) directly would remove it.
    x6 = x[:, :, :6].astype(jnp.float32)
    xt = jnp.transpose(x6, (2, 0, 1))                          # (6, B, P)
    if B_pad != B or P_pad != P:
        xt = jnp.pad(xt, ((0, 0), (0, B_pad - B), (0, P_pad - P)))

    kernel = functools.partial(_pod_kernel, num_bins=num_bins, C=C, P=P,
                               P_pad=P_pad, TP=TP, n_chunks=n_chunks)

    out = pl.pallas_call(
        kernel,
        out_shape=jax.ShapeDtypeStruct((B_pad, C, 10), jnp.float32),
        grid_spec=pltpu.PrefetchScalarGridSpec(
            num_scalar_prefetch=0,
            grid=(n_steps,),
            in_specs=[pl.BlockSpec((6, BB, P_pad), lambda i: (0, i, 0))],
            out_specs=pl.BlockSpec((BB, C, 10), lambda i: (i, 0, 0)),
        ),
        compiler_params=pltpu.CompilerParams(
            dimension_semantics=("parallel",),
            vmem_limit_bytes=32 * 1024 * 1024),
    )(xt)

    # (B, C, 10) -> (B, C*10); row-major already matches torch's
    # [cell0: freq, mean(3), cov(6), cell1: ...] flat layout.
    return out[:B].reshape(B, C * 10)


def _reference_pod(x, num_bins):
    """Pure-JAX mirror of the PyTorch forward (for the self-check)."""
    x = x[..., :6].astype(jnp.float32)
    pos, ori = x[..., 0:3], x[..., 3:6]
    B, P, _ = x.shape
    C = num_bins ** 3
    bbox_max = jnp.max(jnp.abs(pos), axis=(1, 2), keepdims=True)
    thickness = jnp.maximum(2.0 * bbox_max, 1e-5)
    pic = (pos + bbox_max) / thickness
    ci = jnp.clip((pic * num_bins).astype(jnp.int32), 0, num_bins - 1)
    cell = (ci[..., 0] * num_bins + ci[..., 1]) * num_bins + ci[..., 2]     # (B, P)
    onehot = jax.nn.one_hot(cell, C, dtype=jnp.float32)                     # (B, P, C)
    freq = jnp.sum(onehot, axis=1)[..., None]                               # (B, C, 1)
    centers = (ci.astype(jnp.float32) + 0.5) / num_bins
    sum_cen = jnp.einsum('bpc,bpk->bck', onehot, pic - centers)             # (B, C, 3)
    ox, oy, oz = ori[..., 0], ori[..., 1], ori[..., 2]
    cov = jnp.stack([ox * ox, ox * oy, ox * oz, oy * oy, oy * oz, oz * oz], axis=-1)
    sum_cov = jnp.einsum('bpc,bpk->bck', onehot, cov)                       # (B, C, 6)
    freq_c = jnp.maximum(freq, 1.0)
    uprefix = 1.0 / jnp.sqrt(freq_c)
    f_all = jnp.concatenate(
        [0.001 * freq * uprefix, sum_cen * uprefix, sum_cov / freq_c], axis=-1)
    f_all = f_all.reshape(B, C * 10)
    nrm = jnp.sqrt(jnp.sum(f_all * f_all, axis=1, keepdims=True))
    return f_all / jnp.maximum(nrm, 1e-12)


if __name__ == "__main__":
    key = jax.random.PRNGKey(0)
    pod_fn = jax.jit(functools.partial(handcrafted_pod_extractor, num_bins=NUM_BINS))

    def run_case(B, P):
        k1, k2 = jax.random.split(jax.random.fold_in(key, B * 10000 + P))
        pos = jax.random.normal(k1, (B, P, 3), dtype=jnp.float32)
        ori = jax.random.normal(k2, (B, P, 3), dtype=jnp.float32)
        x = jnp.concatenate([pos, ori], axis=-1)                # (B, P, 6)
        feat = jax.block_until_ready(pod_fn(x))
        assert feat.shape == (B, NUM_BINS ** 3 * 10)
        ref = _reference_pod(x, NUM_BINS)
        err = float(jnp.max(jnp.abs(feat - ref)))
        assert err < 1e-4, f"B={B} P={P}: max abs error vs reference: {err}"

    run_case(2, 128)    # lane-aligned P, single chunk
    run_case(3, 200)    # P padded to 256 -> exercises the validity masking
    run_case(4, 1200)   # multi-chunk point loop (3 chunks) + masking
    print("KERNEL_OK")
</pallas_src>

<mosaic_0001>
module attributes {stable_mosaic.version = 11 : i64} {
  func.func @_pod_kernel(%arg0: i32, %arg1: memref<6x2x128xf32, #tpu.memory_space<vmem>>, %arg2: memref<2x64x10xf32, #tpu.memory_space<vmem>>) attributes {dimension_semantics = [#tpu.dimension_semantics<parallel>], iteration_bounds = array<i64: 1>, scalar_prefetch = 0 : i64, scratch_operands = 0 : i64, tpu.core_type = #tpu.core_type<tc>, window_params = [{transform_indices = @transform_0, window_bounds = array<i64: 6, 2, 128>}, {transform_indices = @transform_1, window_bounds = array<i64: 2, 64, 10>}]} {
    %c0 = arith.constant 0 : index
    %c0_0 = arith.constant 0 : index
    %c0_1 = arith.constant 0 : index
    %0 = vector.load %arg1[%c0, %c0_0, %c0_1] : memref<6x2x128xf32, #tpu.memory_space<vmem>>, vector<1x2x128xf32>
    %1 = vector.shape_cast %0 : vector<1x2x128xf32> to vector<2x128xf32>
    %c1 = arith.constant 1 : index
    %c0_2 = arith.constant 0 : index
    %c0_3 = arith.constant 0 : index
    %2 = vector.load %arg1[%c1, %c0_2, %c0_3] : memref<6x2x128xf32, #tpu.memory_space<vmem>>, vector<1x2x128xf32>
    %3 = vector.shape_cast %2 : vector<1x2x128xf32> to vector<2x128xf32>
    %c2 = arith.constant 2 : index
    %c0_4 = arith.constant 0 : index
    %c0_5 = arith.constant 0 : index
    %4 = vector.load %arg1[%c2, %c0_4, %c0_5] : memref<6x2x128xf32, #tpu.memory_space<vmem>>, vector<1x2x128xf32>
    %5 = vector.shape_cast %4 : vector<1x2x128xf32> to vector<2x128xf32>
    %6 = math.absf %1 : vector<2x128xf32>
    %7 = math.absf %3 : vector<2x128xf32>
    %8 = math.absf %5 : vector<2x128xf32>
    %9 = arith.maximumf %7, %8 : vector<2x128xf32>
    %10 = arith.maximumf %6, %9 : vector<2x128xf32>
    %cst = arith.constant dense<0xFF800000> : vector<2xf32>
    %11 = vector.multi_reduction <maximumf>, %10, %cst [1] : vector<2x128xf32> to vector<2xf32>
    %12 = vector.shape_cast %11 : vector<2xf32> to vector<2x1xf32>
    %cst_6 = arith.constant 2.000000e+00 : f32
    %13 = vector.broadcast %cst_6 : f32 to vector<2x1xf32>
    %14 = arith.mulf %13, %12 : vector<2x1xf32>
    %cst_7 = arith.constant 9.99999974E-6 : f32
    %15 = vector.broadcast %cst_7 : f32 to vector<2x1xf32>
    %16 = arith.maximumf %14, %15 : vector<2x1xf32>
    %cst_8 = arith.constant 1.000000e+00 : f32
    %17 = vector.broadcast %cst_8 : f32 to vector<2x1xf32>
    %18 = arith.divf %17, %16 : vector<2x1xf32>
    %19 = tpu.iota {dimensions = array<i32: 1>} : vector<1x64x1xi32>
    %cst_9 = arith.constant 0.000000e+00 : f32
    %20 = vector.broadcast %cst_9 : f32 to vector<2x64x10xf32>
    %c0_10 = arith.constant 0 : index
    %c0_11 = arith.constant 0 : index
    %c0_12 = arith.constant 0 : index
    %21 = vector.load %arg2[%c0_10, %c0_11, %c0_12] : memref<2x64x10xf32, #tpu.memory_space<vmem>>, vector<2x64x10xf32>
    tpu.vector_store %arg2[%c0_10, %c0_11, %c0_12], %20 {strides = array<i32>} : memref<2x64x10xf32, #tpu.memory_space<vmem>>, vector<2x64x10xf32>,
    %cst_13 = arith.constant 2.500000e-01 : f32
    %c0_i32 = arith.constant 0 : i32
    %c1_i32 = arith.constant 1 : i32
    %22 = arith.muli %c0_i32, %c1_i32 : i32
    %c0_i32_14 = arith.constant 0 : i32
    %23 = arith.addi %c0_i32_14, %22 : i32
    %c128_i32 = arith.constant 128 : i32
    %24 = arith.muli %23, %c128_i32 : i32
    %25 = tpu.assume_multiple %24, 128 : i32
    %c0_15 = arith.constant 0 : index
    %c0_16 = arith.constant 0 : index
    %26 = arith.index_cast %25 : i32 to index
    %27 = vector.load %arg1[%c0_15, %c0_16, %26] : memref<6x2x128xf32, #tpu.memory_space<vmem>>, vector<1x2x128xf32>
    %28 = vector.shape_cast %27 : vector<1x2x128xf32> to vector<2x128xf32>
    %c1_17 = arith.constant 1 : index
    %c0_18 = arith.constant 0 : index
    %29 = arith.index_cast %25 : i32 to index
    %30 = vector.load %arg1[%c1_17, %c0_18, %29] : memref<6x2x128xf32, #tpu.memory_space<vmem>>, vector<1x2x128xf32>
    %31 = vector.shape_cast %30 : vector<1x2x128xf32> to vector<2x128xf32>
    %c2_19 = arith.constant 2 : index
    %c0_20 = arith.constant 0 : index
    %32 = arith.index_cast %25 : i32 to index
    %33 = vector.load %arg1[%c2_19, %c0_20, %32] : memref<6x2x128xf32, #tpu.memory_space<vmem>>, vector<1x2x128xf32>
    %34 = vector.shape_cast %33 : vector<1x2x128xf32> to vector<2x128xf32>
    %c3 = arith.constant 3 : index
    %c0_21 = arith.constant 0 : index
    %35 = arith.index_cast %25 : i32 to index
    %36 = vector.load %arg1[%c3, %c0_21, %35] : memref<6x2x128xf32, #tpu.memory_space<vmem>>, vector<1x2x128xf32>
    %37 = vector.shape_cast %36 : vector<1x2x128xf32> to vector<2x128xf32>
    %c4 = arith.constant 4 : index
    %c0_22 = arith.constant 0 : index
    %38 = arith.index_cast %25 : i32 to index
    %39 = vector.load %arg1[%c4, %c0_22, %38] : memref<6x2x128xf32, #tpu.memory_space<vmem>>, vector<1x2x128xf32>
    %40 = vector.shape_cast %39 : vector<1x2x128xf32> to vector<2x128xf32>
    %c5 = arith.constant 5 : index
    %c0_23 = arith.constant 0 : index
    %41 = arith.index_cast %25 : i32 to index
    %42 = vector.load %arg1[%c5, %c0_23, %41] : memref<6x2x128xf32, #tpu.memory_space<vmem>>, vector<1x2x128xf32>
    %43 = vector.shape_cast %42 : vector<1x2x128xf32> to vector<2x128xf32>
    %44 = vector.broadcast %12 : vector<2x1xf32> to vector<2x128xf32>
    %45 = arith.addf %28, %44 : vector<2x128xf32>
    %46 = vector.broadcast %18 : vector<2x1xf32> to vector<2x128xf32>
    %47 = arith.mulf %45, %46 : vector<2x128xf32>
    %48 = vector.broadcast %12 : vector<2x1xf32> to vector<2x128xf32>
    %49 = arith.addf %31, %48 : vector<2x128xf32>
    %50 = vector.broadcast %18 : vector<2x1xf32> to vector<2x128xf32>
    %51 = arith.mulf %49, %50 : vector<2x128xf32>
    %52 = vector.broadcast %12 : vector<2x1xf32> to vector<2x128xf32>
    %53 = arith.addf %34, %52 : vector<2x128xf32>
    %54 = vector.broadcast %18 : vector<2x1xf32> to vector<2x128xf32>
    %55 = arith.mulf %53, %54 : vector<2x128xf32>
    %cst_24 = arith.constant 4.000000e+00 : f32
    %56 = vector.broadcast %cst_24 : f32 to vector<2x128xf32>
    %57 = arith.mulf %47, %56 : vector<2x128xf32>
    %58 = arith.fptosi %57 : vector<2x128xf32> to vector<2x128xi32>
    %c0_i32_25 = arith.constant 0 : i32
    %c3_i32 = arith.constant 3 : i32
    %59 = vector.broadcast %c0_i32_25 : i32 to vector<2x128xi32>
    %60 = arith.maxsi %59, %58 : vector<2x128xi32>
    %61 = vector.broadcast %c3_i32 : i32 to vector<2x128xi32>
    %62 = arith.minsi %61, %60 : vector<2x128xi32>
    %cst_26 = arith.constant 4.000000e+00 : f32
    %63 = vector.broadcast %cst_26 : f32 to vector<2x128xf32>
    %64 = arith.mulf %51, %63 : vector<2x128xf32>
    %65 = arith.fptosi %64 : vector<2x128xf32> to vector<2x128xi32>
    %c0_i32_27 = arith.constant 0 : i32
    %c3_i32_28 = arith.constant 3 : i32
    %66 = vector.broadcast %c0_i32_27 : i32 to vector<2x128xi32>
    %67 = arith.maxsi %66, %65 : vector<2x128xi32>
    %68 = vector.broadcast %c3_i32_28 : i32 to vector<2x128xi32>
    %69 = arith.minsi %68, %67 : vector<2x128xi32>
    %cst_29 = arith.constant 4.000000e+00 : f32
    %70 = vector.broadcast %cst_29 : f32 to vector<2x128xf32>
    %71 = arith.mulf %55, %70 : vector<2x128xf32>
    %72 = arith.fptosi %71 : vector<2x128xf32> to vector<2x128xi32>
    %c0_i32_30 = arith.constant 0 : i32
    %c3_i32_31 = arith.constant 3 : i32
    %73 = vector.broadcast %c0_i32_30 : i32 to vector<2x128xi32>
    %74 = arith.maxsi %73, %72 : vector<2x128xi32>
    %75 = vector.broadcast %c3_i32_31 : i32 to vector<2x128xi32>
    %76 = arith.minsi %75, %74 : vector<2x128xi32>
    %c4_i32 = arith.constant 4 : i32
    %77 = vector.broadcast %c4_i32 : i32 to vector<2x128xi32>
    %78 = arith.muli %62, %77 : vector<2x128xi32>
    %79 = arith.addi %78, %69 : vector<2x128xi32>
    %c4_i32_32 = arith.constant 4 : i32
    %80 = vector.broadcast %c4_i32_32 : i32 to vector<2x128xi32>
    %81 = arith.muli %79, %80 : vector<2x128xi32>
    %82 = arith.addi %81, %76 : vector<2x128xi32>
    %83 = arith.sitofp %62 : vector<2x128xi32> to vector<2x128xf32>
    %cst_33 = arith.constant 5.000000e-01 : f32
    %84 = vector.broadcast %cst_33 : f32 to vector<2x128xf32>
    %85 = arith.addf %83, %84 : vector<2x128xf32>
    %86 = vector.broadcast %cst_13 : f32 to vector<2x128xf32>
    %87 = arith.mulf %85, %86 : vector<2x128xf32>
    %88 = arith.subf %47, %87 : vector<2x128xf32>
    %89 = arith.sitofp %69 : vector<2x128xi32> to vector<2x128xf32>
    %cst_34 = arith.constant 5.000000e-01 : f32
    %90 = vector.broadcast %cst_34 : f32 to vector<2x128xf32>
    %91 = arith.addf %89, %90 : vector<2x128xf32>
    %92 = vector.broadcast %cst_13 : f32 to vector<2x128xf32>
    %93 = arith.mulf %91, %92 : vector<2x128xf32>
    %94 = arith.subf %51, %93 : vector<2x128xf32>
    %95 = arith.sitofp %76 : vector<2x128xi32> to vector<2x128xf32>
    %cst_35 = arith.constant 5.000000e-01 : f32
    %96 = vector.broadcast %cst_35 : f32 to vector<2x128xf32>
    %97 = arith.addf %95, %96 : vector<2x128xf32>
    %98 = vector.broadcast %cst_13 : f32 to vector<2x128xf32>
    %99 = arith.mulf %97, %98 : vector<2x128xf32>
    %100 = arith.subf %55, %99 : vector<2x128xf32>
    %cst_36 = arith.constant 1.000000e+00 : f32
    %101 = vector.broadcast %cst_36 : f32 to vector<2x128xf32>
    %102 = arith.mulf %37, %37 : vector<2x128xf32>
    %103 = arith.mulf %37, %40 : vector<2x128xf32>
    %104 = arith.mulf %37, %43 : vector<2x128xf32>
    %105 = arith.mulf %40, %40 : vector<2x128xf32>
    %106 = arith.mulf %40, %43 : vector<2x128xf32>
    %107 = arith.mulf %43, %43 : vector<2x128xf32>
    %108 = vector.shape_cast %101 : vector<2x128xf32> to vector<2x1x128xf32>
    %109 = vector.shape_cast %88 : vector<2x128xf32> to vector<2x1x128xf32>
    %110 = vector.shape_cast %94 : vector<2x128xf32> to vector<2x1x128xf32>
    %111 = vector.shape_cast %100 : vector<2x128xf32> to vector<2x1x128xf32>
    %112 = vector.shape_cast %102 : vector<2x128xf32> to vector<2x1x128xf32>
    %113 = vector.shape_cast %103 : vector<2x128xf32> to vector<2x1x128xf32>
    %114 = vector.shape_cast %104 : vector<2x128xf32> to vector<2x1x128xf32>
    %115 = vector.shape_cast %105 : vector<2x128xf32> to vector<2x1x128xf32>
    %116 = vector.shape_cast %106 : vector<2x128xf32> to vector<2x1x128xf32>
    %117 = vector.shape_cast %107 : vector<2x128xf32> to vector<2x1x128xf32>
    %118 = tpu.concatenate %108, %109, %110, %111, %112, %113, %114, %115, %116, %117 in 1 : vector<2x1x128xf32>, vector<2x1x128xf32>, vector<2x1x128xf32>, vector<2x1x128xf32>, vector<2x1x128xf32>, vector<2x1x128xf32>, vector<2x1x128xf32>, vector<2x1x128xf32>, vector<2x1x128xf32>, vector<2x1x128xf32> -> vector<2x10x128xf32>
    %119 = vector.shape_cast %82 : vector<2x128xi32> to vector<2x1x128xi32>
    %120 = vector.broadcast %119 : vector<2x1x128xi32> to vector<2x64x128xi32>
    %121 = vector.broadcast %19 : vector<1x64x1xi32> to vector<2x64x128xi32>
    %122 = arith.cmpi eq, %120, %121 : vector<2x64x128xi32>
    %123 = arith.extui %122 : vector<2x64x128xi1> to vector<2x64x128xi32>
    %124 = arith.sitofp %123 : vector<2x64x128xi32> to vector<2x64x128xf32>
    %c0_37 = arith.constant 0 : index
    %c0_38 = arith.constant 0 : index
    %c0_39 = arith.constant 0 : index
    %125 = vector.load %arg2[%c0_37, %c0_38, %c0_39] : memref<2x64x10xf32, #tpu.memory_space<vmem>>, vector<2x64x10xf32>
    "tpu.trace_start"() <{level = 10 : i32, message = "bcp,bfp->bcf"}> : () -> ()
    %cst_40 = arith.constant dense<0.000000e+00> : vector<2x64x10xf32>
    %126 = tpu.matmul %124, %118, %cst_40 {dimension_numbers = #tpu.dot_dimension_numbers<[2], [2], [1], [1], [0, 0, 0, 1, 1, 1], [0], [0]>} : vector<2x64x128xf32>, vector<2x10x128xf32>, vector<2x64x10xf32> -> vector<2x64x10xf32>
    "tpu.trace_stop"() : () -> ()
    %127 = arith.addf %125, %126 : vector<2x64x10xf32>
    %c0_41 = arith.constant 0 : index
    %c0_42 = arith.constant 0 : index
    %c0_43 = arith.constant 0 : index
    %128 = vector.load %arg2[%c0_41, %c0_42, %c0_43] : memref<2x64x10xf32, #tpu.memory_space<vmem>>, vector<2x64x10xf32>
    tpu.vector_store %arg2[%c0_41, %c0_42, %c0_43], %127 {strides = array<i32>} : memref<2x64x10xf32, #tpu.memory_space<vmem>>, vector<2x64x10xf32>,
    %c1_i32_44 = arith.constant 1 : i32
    %c0_45 = arith.constant 0 : index
    %c0_46 = arith.constant 0 : index
    %c0_47 = arith.constant 0 : index
    %129 = vector.load %arg2[%c0_45, %c0_46, %c0_47] : memref<2x64x10xf32, #tpu.memory_space<vmem>>, vector<2x64x10xf32>
    %130 = vector.extract_strided_slice %129 {offsets = [0, 0, 0], sizes = [2, 64, 1], strides = [1, 1, 1]} : vector<2x64x10xf32> to vector<2x64x1xf32>
    %cst_48 = arith.constant 1.000000e+00 : f32
    %131 = vector.broadcast %cst_48 : f32 to vector<2x64x1xf32>
    %132 = arith.maximumf %130, %131 : vector<2x64x1xf32>
    %133 = math.sqrt %132 : vector<2x64x1xf32>
    %cst_49 = arith.constant 1.000000e+00 : f32
    %134 = vector.broadcast %cst_49 : f32 to vector<2x64x1xf32>
    %135 = arith.divf %134, %133 : vector<2x64x1xf32>
    %cst_50 = arith.constant 1.000000e-03 : f32
    %136 = vector.broadcast %cst_50 : f32 to vector<2x64x1xf32>
    %137 = arith.mulf %136, %130 : vector<2x64x1xf32>
    %138 = arith.mulf %137, %135 : vector<2x64x1xf32>
    %139 = vector.extract_strided_slice %129 {offsets = [0, 0, 1], sizes = [2, 64, 3], strides = [1, 1, 1]} : vector<2x64x10xf32> to vector<2x64x3xf32>
    %140 = vector.broadcast %135 : vector<2x64x1xf32> to vector<2x64x3xf32>
    %141 = arith.mulf %139, %140 : vector<2x64x3xf32>
    %142 = vector.extract_strided_slice %129 {offsets = [0, 0, 4], sizes = [2, 64, 6], strides = [1, 1, 1]} : vector<2x64x10xf32> to vector<2x64x6xf32>
    %143 = vector.broadcast %132 : vector<2x64x1xf32> to vector<2x64x6xf32>
    %144 = arith.divf %142, %143 : vector<2x64x6xf32>
    %145 = tpu.concatenate %138, %141, %144 in 2 : vector<2x64x1xf32>, vector<2x64x3xf32>, vector<2x64x6xf32> -> vector<2x64x10xf32>
    %146 = arith.mulf %145, %145 : vector<2x64x10xf32>
    %cst_51 = arith.constant dense<0.000000e+00> : vector<2x64xf32>
    %147 = vector.multi_reduction <add>, %146, %cst_51 [2] : vector<2x64x10xf32> to vector<2x64xf32>
    %148 = vector.shape_cast %147 : vector<2x64xf32> to vector<2x64x1xf32>
    %cst_52 = arith.constant dense<0.000000e+00> : vector<2x1xf32>
    %149 = vector.multi_reduction <add>, %148, %cst_52 [1] : vector<2x64x1xf32> to vector<2x1xf32>
    %150 = vector.shape_cast %149 : vector<2x1xf32> to vector<2x1x1xf32>
    %151 = math.sqrt %150 : vector<2x1x1xf32>
    %cst_53 = arith.constant 9.99999996E-13 : f32
    %152 = vector.broadcast %cst_53 : f32 to vector<2x1x1xf32>
    %153 = arith.maximumf %151, %152 : vector<2x1x1xf32>
    %cst_54 = arith.constant 1.000000e+00 : f32
    %154 = vector.broadcast %cst_54 : f32 to vector<2x1x1xf32>
    %155 = arith.divf %154, %153 : vector<2x1x1xf32>
    %156 = vector.broadcast %155 : vector<2x1x1xf32> to vector<2x64x10xf32>
    %157 = arith.mulf %145, %156 : vector<2x64x10xf32>
    %c0_55 = arith.constant 0 : index
    %c0_56 = arith.constant 0 : index
    %c0_57 = arith.constant 0 : index
    %158 = vector.load %arg2[%c0_55, %c0_56, %c0_57] : memref<2x64x10xf32, #tpu.memory_space<vmem>>, vector<2x64x10xf32>
    tpu.vector_store %arg2[%c0_55, %c0_56, %c0_57], %157 {strides = array<i32>} : memref<2x64x10xf32, #tpu.memory_space<vmem>>, vector<2x64x10xf32>,
    return
  }
  func.func @transform_0(%arg0: i32) -> (i32, i32, i32) {
    %c0_i32 = arith.constant 0 : i32
    %c0_i32_0 = arith.constant 0 : i32
    %c0_i32_1 = arith.constant 0 : i32
    return %c0_i32, %arg0, %c0_i32_0 : i32, i32, i32
  }
  func.func @transform_1(%arg0: i32) -> (i32, i32, i32) {
    %c0_i32 = arith.constant 0 : i32
    %c0_i32_0 = arith.constant 0 : i32
    %c0_i32_1 = arith.constant 0 : i32
    return %arg0, %c0_i32, %c0_i32_0 : i32, i32, i32
  }
}

</mosaic_0001>

<llo_original>
// kernel: handcrafted_pod_extractor.1
$region0: #{handcrafted_pod_extractor.1}
  #allocation0 [shape = 'u32[]', space=smem, size = 0x4, offset = 0x4, fixed_abs, tag = 'smem constant byte address 0x4 - core index']
  #allocation1 [shape = 'u32[144,128]{1,0:T(1,128)}', space=vmem, size = 0x12000, scoped, tag = 'internal scratch']
  %s0 = inlined_call_operand.hbm [shape: f32[6,2,128], index: 0, kind: input, shape index: {}]
  %s1 = inlined_call_operand.vmem [shape: f32[2,64,10], index: 1, kind: output, shape index: {}]
  %s2 = sld [smem:[#allocation0]]
  $region18: #{handcrafted_pod_extractor.1} parent=0
    _
  %s4 = ssub.s32 1, %s2
  %s5 = scalar_select 0, %s4, %s2
  $region1: #{handcrafted_pod_extractor.1} parent=0
    #allocation2 [shape = 'u8[6144]{0}', space=vmem, size = 0x1800, scoped, tag = 'input window, operand 0, single buffered']
    #allocation3 [shape = 's32[1]{0}', space=sflag, size = 0x4, scoped, tag = 'scoped memory for handcrafted_pod_extractor.1']
    %6 = vsyncpa [#allocation3], 0
    // Predicated region
    $region2: #{handcrafted_pod_extractor.1} parent=1 // pred_check
      _
    $region3: #{handcrafted_pod_extractor.1} parent=1 // pred_check_branch
      %8 = sbr.rel (0) target = $region5
    $region4: #{handcrafted_pod_extractor.1} parent=1 // pred_region
      %s10 = ssub.s32 192, 192
      %11 = vsyncadd [#allocation3], %s10
      %s12 = sshll.u32 [#allocation2], 4
      %s13 = int_to_ptr.vmem [resolvable:$true] %s12
      %18 = dma.hbm_to_vmem [thread:$0]  %s0, 192, %s13, [#allocation3], 32, 32, 2
    $region5: #{handcrafted_pod_extractor.1} parent=1 // pred_fallthru
      _
    // Predicated region
    $region6: #{handcrafted_pod_extractor.1} parent=1 // pred_check
      _
    $region7: #{handcrafted_pod_extractor.1} parent=1 // pred_check_branch
      %20 = sbr.rel (0) target = $region9
    $region8: #{handcrafted_pod_extractor.1} parent=1 // pred_region
      %21 = dma.done [#allocation3], 192
    $region9: #{handcrafted_pod_extractor.1} parent=1 // pred_fallthru
      _
    %v22 = vld [vmem:[#allocation2] sm:$0x3]
    %s23 = scalar_lea.vmem [#allocation2], 2
    %v24 = vld [vmem:[%s23] sm:$0x3]
    %s25 = scalar_lea.vmem [#allocation2], 4
    %v26 = vld [vmem:[%s25] sm:$0x3]
    %v27 = vand.u32 2147483647, %v22
    %v28 = vand.u32 2147483647, %v24
    %v29 = vand.u32 2147483647, %v26
    %v30 = vmax.f32 %v28, %v29
    %v31 = vmax.f32 %v27, %v30
    %vm32 = vcmask 1041408
    %v33 = vsel %vm32, %v31, -inf
    %34 = vmax.xlane.f32.xlu0 %v33
    %v35 = vpop.xlane.xlu0 %34
    %v36 = vmul.f32 %v35, 2.0
    %v37 = vmax.f32 %v36, 1e-05
    %v38 = vrcp.pop %v37
    %v39 = vmul.f32 1.0, %v38
    %v40 = vlaneseq
    %v41 = vshrl.u32 %v40, 7
    %v42 = vadd.s32 %v41, 8
    %v43 = vadd.s32 %v41, 16
    %v44 = vadd.s32 %v41, 24
    %v45 = vadd.s32 %v41, 32
    %v46 = vadd.s32 %v41, 40
    %v47 = vadd.s32 %v41, 48
    %v48 = vadd.s32 %v41, 56
    %vm49 = vcmask 80896
    %50 = vst.msk [vmem:[%s1] sm:$0xff] %vm49, 0.0
    %51 = vst.msk [vmem:[%s1 + $0x8] sm:$0xff] %vm49, 0.0
    %52 = vst.msk [vmem:[%s1 + $0x10] sm:$0xff] %vm49, 0.0
    %53 = vst.msk [vmem:[%s1 + $0x18] sm:$0xff] %vm49, 0.0
    %54 = vst.msk [vmem:[%s1 + $0x20] sm:$0xff] %vm49, 0.0
    %55 = vst.msk [vmem:[%s1 + $0x28] sm:$0xff] %vm49, 0.0
    %56 = vst.msk [vmem:[%s1 + $0x30] sm:$0xff] %vm49, 0.0
    %57 = vst.msk [vmem:[%s1 + $0x38] sm:$0xff] %vm49, 0.0
    %58 = vst.msk [vmem:[%s1 + $0x40] sm:$0xff] %vm49, 0.0
    %59 = vst.msk [vmem:[%s1 + $0x48] sm:$0xff] %vm49, 0.0
    %60 = vst.msk [vmem:[%s1 + $0x50] sm:$0xff] %vm49, 0.0
    %61 = vst.msk [vmem:[%s1 + $0x58] sm:$0xff] %vm49, 0.0
    %62 = vst.msk [vmem:[%s1 + $0x60] sm:$0xff] %vm49, 0.0
    %63 = vst.msk [vmem:[%s1 + $0x68] sm:$0xff] %vm49, 0.0
    %64 = vst.msk [vmem:[%s1 + $0x70] sm:$0xff] %vm49, 0.0
    %65 = vst.msk [vmem:[%s1 + $0x78] sm:$0xff] %vm49, 0.0
    %v66 = vld [vmem:[#allocation2] sm:$0x3]
    %s67 = sadd.s32 0, 2
    %s68 = scalar_lea.vmem [#allocation2], %s67
    %v69 = vld [vmem:[%s68] sm:$0x3]
    %s70 = sadd.s32 0, 4
    %s71 = scalar_lea.vmem [#allocation2], %s70
    %v72 = vld [vmem:[%s71] sm:$0x3]
    %s73 = sadd.s32 0, 6
    %s74 = scalar_lea.vmem [#allocation2], %s73
    %v75 = vld [vmem:[%s74] sm:$0x3]
    %s76 = sadd.s32 0, 8
    %s77 = scalar_lea.vmem [#allocation2], %s76
    %v78 = vld [vmem:[%s77] sm:$0x3]
    %s79 = sadd.s32 0, 10
    %s80 = scalar_lea.vmem [#allocation2], %s79
    %v81 = vld [vmem:[%s80] sm:$0x3]
    %v82 = vadd.f32 %v66, %v35
    %v83 = vmul.f32 %v82, %v39
    %v84 = vadd.f32 %v69, %v35
    %v85 = vmul.f32 %v84, %v39
    %v86 = vadd.f32 %v72, %v35
    %v87 = vmul.f32 %v86, %v39
    %v88 = vmul.f32 %v83, 4.0
    %v89 = vcvt.f32.s32.to.zero.pseudo %v88
    %vm90 = vcmp.gt.s32.totalorder %v89, 0
    %v91 = vsel %vm90, %v89, 0
    %vm92 = vcmp.lt.s32.totalorder %v91, 3
    %v93 = vsel %vm92, %v91, 3
    %v94 = vmul.f32 %v85, 4.0
    %v95 = vcvt.f32.s32.to.zero.pseudo %v94
    %vm96 = vcmp.gt.s32.totalorder %v95, 0
    %v97 = vsel %vm96, %v95, 0
    %vm98 = vcmp.lt.s32.totalorder %v97, 3
    %v99 = vsel %vm98, %v97, 3
    %v100 = vmul.f32 %v87, 4.0
    %v101 = vcvt.f32.s32.to.zero.pseudo %v100
    %vm102 = vcmp.gt.s32.totalorder %v101, 0
    %v103 = vsel %vm102, %v101, 0
    %vm104 = vcmp.lt.s32.totalorder %v103, 3
    %v105 = vsel %vm104, %v103, 3
    %v106 = vmul.u32 %v93, 4
    %v107 = vadd.s32 %v106, %v99
    %v108 = vmul.u32 %v107, 4
    %v109 = vadd.s32 %v108, %v105
    %v110 = vcvt.s32.f32 %v93
    %v111 = vadd.f32 %v110, 0.5
    %v112 = vmul.f32 %v111, 0.25
    %v113 = vsub.f32 %v83, %v112
    %v114 = vcvt.s32.f32 %v99
    %v115 = vadd.f32 %v114, 0.5
    %v116 = vmul.f32 %v115, 0.25
    %v117 = vsub.f32 %v85, %v116
    %v118 = vcvt.s32.f32 %v105
    %v119 = vadd.f32 %v118, 0.5
    %v120 = vmul.f32 %v119, 0.25
    %v121 = vsub.f32 %v87, %v120
    %v122 = vmul.f32 %v75, %v75
    %v123 = vmul.f32 %v75, %v78
    %v124 = vmul.f32 %v75, %v81
    %v125 = vmul.f32 %v78, %v78
    %v126 = vmul.f32 %v78, %v81
    %v127 = vmul.f32 %v81, %v81
    %v130 = vunpack.c.l.s4 1966171168
    %v131 = vunpack.c.0.s8 %v130
    %v132 = vlaneseq
    %v133 = vshrl.u32 %v132, 7
    %v134 = vsub.s32 %v131, %v133
    %v135 = vrot.slane %v113, %v134
    %v136 = vcombine.high %v135, %v135
    %v138 = vunpack.c.l.s4 1966171168
    %v139 = vunpack.c.0.s8 %v138
    %v140 = vlaneseq
    %v141 = vshrl.u32 %v140, 7
    %v142 = vsub.s32 %v139, %v141
    %v143 = vrot.slane %v135, %v142
    %v145 = vunpack.c.l.s4 1966171168
    %v146 = vunpack.c.0.s8 %v145
    %v147 = vlaneseq
    %v148 = vshrl.u32 %v147, 7
    %v149 = vsub.s32 %v146, %v148
    %v150 = vrot.slane %v136, %v149
    %v153 = vunpack.c.l.s4 1966171168
    %v154 = vunpack.c.0.s8 %v153
    %v155 = vlaneseq
    %v156 = vshrl.u32 %v155, 7
    %v157 = vsub.s32 %v154, %v156
    %v158 = vrot.slane %v117, %v157
    %v159 = vcombine.high %v158, %v158
    %v161 = vunpack.c.l.s4 1966171168
    %v162 = vunpack.c.0.s8 %v161
    %v163 = vlaneseq
    %v164 = vshrl.u32 %v163, 7
    %v165 = vsub.s32 %v162, %v164
    %v166 = vrot.slane %v158, %v165
    %v168 = vunpack.c.l.s4 1966171168
    %v169 = vunpack.c.0.s8 %v168
    %v170 = vlaneseq
    %v171 = vshrl.u32 %v170, 7
    %v172 = vsub.s32 %v169, %v171
    %v173 = vrot.slane %v159, %v172
    %v176 = vunpack.c.l.s4 1966171168
    %v177 = vunpack.c.0.s8 %v176
    %v178 = vlaneseq
    %v179 = vshrl.u32 %v178, 7
    %v180 = vsub.s32 %v177, %v179
    %v181 = vrot.slane %v121, %v180
    %v182 = vcombine.high %v181, %v181
    %v184 = vunpack.c.l.s4 1966171168
    %v185 = vunpack.c.0.s8 %v184
    %v186 = vlaneseq
    %v187 = vshrl.u32 %v186, 7
    %v188 = vsub.s32 %v185, %v187
    %v189 = vrot.slane %v181, %v188
    %v191 = vunpack.c.l.s4 1966171168
    %v192 = vunpack.c.0.s8 %v191
    %v193 = vlaneseq
    %v194 = vshrl.u32 %v193, 7
    %v195 = vsub.s32 %v192, %v194
    %v196 = vrot.slane %v182, %v195
    %v199 = vunpack.c.l.s4 1966171168
    %v200 = vunpack.c.0.s8 %v199
    %v201 = vlaneseq
    %v202 = vshrl.u32 %v201, 7
    %v203 = vsub.s32 %v200, %v202
    %v204 = vrot.slane %v122, %v203
    %v205 = vcombine.high %v204, %v204
    %v207 = vunpack.c.l.s4 1966171168
    %v208 = vunpack.c.0.s8 %v207
    %v209 = vlaneseq
    %v210 = vshrl.u32 %v209, 7
    %v211 = vsub.s32 %v208, %v210
    %v212 = vrot.slane %v204, %v211
    %v214 = vunpack.c.l.s4 1966171168
    %v215 = vunpack.c.0.s8 %v214
    %v216 = vlaneseq
    %v217 = vshrl.u32 %v216, 7
    %v218 = vsub.s32 %v215, %v217
    %v219 = vrot.slane %v205, %v218
    %v222 = vunpack.c.l.s4 1966171168
    %v223 = vunpack.c.0.s8 %v222
    %v224 = vlaneseq
    %v225 = vshrl.u32 %v224, 7
    %v226 = vsub.s32 %v223, %v225
    %v227 = vrot.slane %v123, %v226
    %v228 = vcombine.high %v227, %v227
    %v230 = vunpack.c.l.s4 1966171168
    %v231 = vunpack.c.0.s8 %v230
    %v232 = vlaneseq
    %v233 = vshrl.u32 %v232, 7
    %v234 = vsub.s32 %v231, %v233
    %v235 = vrot.slane %v227, %v234
    %v237 = vunpack.c.l.s4 1966171168
    %v238 = vunpack.c.0.s8 %v237
    %v239 = vlaneseq
    %v240 = vshrl.u32 %v239, 7
    %v241 = vsub.s32 %v238, %v240
    %v242 = vrot.slane %v228, %v241
    %v245 = vunpack.c.l.s4 1966171168
    %v246 = vunpack.c.0.s8 %v245
    %v247 = vlaneseq
    %v248 = vshrl.u32 %v247, 7
    %v249 = vsub.s32 %v246, %v248
    %v250 = vrot.slane %v124, %v249
    %v251 = vcombine.high %v250, %v250
    %v253 = vunpack.c.l.s4 1966171168
    %v254 = vunpack.c.0.s8 %v253
    %v255 = vlaneseq
    %v256 = vshrl.u32 %v255, 7
    %v257 = vsub.s32 %v254, %v256
    %v258 = vrot.slane %v250, %v257
    %v260 = vunpack.c.l.s4 1966171168
    %v261 = vunpack.c.0.s8 %v260
    %v262 = vlaneseq
    %v263 = vshrl.u32 %v262, 7
    %v264 = vsub.s32 %v261, %v263
    %v265 = vrot.slane %v251, %v264
    %v268 = vunpack.c.l.s4 1966171168
    %v269 = vunpack.c.0.s8 %v268
    %v270 = vlaneseq
    %v271 = vshrl.u32 %v270, 7
    %v272 = vsub.s32 %v269, %v271
    %v273 = vrot.slane %v125, %v272
    %v274 = vcombine.high %v273, %v273
    %v276 = vunpack.c.l.s4 1966171168
    %v277 = vunpack.c.0.s8 %v276
    %v278 = vlaneseq
    %v279 = vshrl.u32 %v278, 7
    %v280 = vsub.s32 %v277, %v279
    %v281 = vrot.slane %v273, %v280
    %v283 = vunpack.c.l.s4 1966171168
    %v284 = vunpack.c.0.s8 %v283
    %v285 = vlaneseq
    %v286 = vshrl.u32 %v285, 7
    %v287 = vsub.s32 %v284, %v286
    %v288 = vrot.slane %v274, %v287
    %v291 = vunpack.c.l.s4 1966171168
    %v292 = vunpack.c.0.s8 %v291
    %v293 = vlaneseq
    %v294 = vshrl.u32 %v293, 7
    %v295 = vsub.s32 %v292, %v294
    %v296 = vrot.slane %v126, %v295
    %v297 = vcombine.high %v296, %v296
    %v299 = vunpack.c.l.s4 1966171168
    %v300 = vunpack.c.0.s8 %v299
    %v301 = vlaneseq
    %v302 = vshrl.u32 %v301, 7
    %v303 = vsub.s32 %v300, %v302
    %v304 = vrot.slane %v296, %v303
    %v306 = vunpack.c.l.s4 1966171168
    %v307 = vunpack.c.0.s8 %v306
    %v308 = vlaneseq
    %v309 = vshrl.u32 %v308, 7
    %v310 = vsub.s32 %v307, %v309
    %v311 = vrot.slane %v297, %v310
    %v316 = vunpack.c.l.s4 1966171168
    %v317 = vunpack.c.0.s8 %v316
    %v318 = vlaneseq
    %v319 = vshrl.u32 %v318, 7
    %v320 = vsub.s32 %v317, %v319
    %v321 = vrot.slane %v127, %v320
    %v322 = vcombine.high %v321, %v321
    %v324 = vunpack.c.l.s4 1966171168
    %v325 = vunpack.c.0.s8 %v324
    %v326 = vlaneseq
    %v327 = vshrl.u32 %v326, 7
    %v328 = vsub.s32 %v325, %v327
    %v329 = vrot.slane %v321, %v328
    %v331 = vunpack.c.l.s4 1966171168
    %v332 = vunpack.c.0.s8 %v331
    %v333 = vlaneseq
    %v334 = vshrl.u32 %v333, 7
    %v335 = vsub.s32 %v332, %v334
    %v336 = vrot.slane %v322, %v335
    %v337 = vlaneseq
    %v338 = vshrl.u32 %v337, 7
    %v339 = vsub.s32 0, %v338
    %v340 = vrot.slane %v143, %v339
    %v341 = vlaneseq
    %v342 = vshrl.u32 %v341, 7
    %v343 = vsub.s32 0, %v342
    %v344 = vrot.slane %v150, %v343
    %v347 = vlaneseq
    %v348 = vshrl.u32 %v347, 7
    %v349 = vsub.s32 0, %v348
    %v350 = vrot.slane %v166, %v349
    %v351 = vlaneseq
    %v352 = vshrl.u32 %v351, 7
    %v353 = vsub.s32 0, %v352
    %v354 = vrot.slane %v173, %v353
    %v357 = vlaneseq
    %v358 = vshrl.u32 %v357, 7
    %v359 = vsub.s32 0, %v358
    %v360 = vrot.slane %v189, %v359
    %v361 = vlaneseq
    %v362 = vshrl.u32 %v361, 7
    %v363 = vsub.s32 0, %v362
    %v364 = vrot.slane %v196, %v363
    %v367 = vlaneseq
    %v368 = vshrl.u32 %v367, 7
    %v369 = vsub.s32 0, %v368
    %v370 = vrot.slane %v212, %v369
    %v371 = vlaneseq
    %v372 = vshrl.u32 %v371, 7
    %v373 = vsub.s32 0, %v372
    %v374 = vrot.slane %v219, %v373
    %v377 = vlaneseq
    %v378 = vshrl.u32 %v377, 7
    %v379 = vsub.s32 0, %v378
    %v380 = vrot.slane %v235, %v379
    %v381 = vlaneseq
    %v382 = vshrl.u32 %v381, 7
    %v383 = vsub.s32 0, %v382
    %v384 = vrot.slane %v242, %v383
    %v387 = vlaneseq
    %v388 = vshrl.u32 %v387, 7
    %v389 = vsub.s32 0, %v388
    %v390 = vrot.slane %v258, %v389
    %v391 = vlaneseq
    %v392 = vshrl.u32 %v391, 7
    %v393 = vsub.s32 0, %v392
    %v394 = vrot.slane %v265, %v393
    %v397 = vlaneseq
    %v398 = vshrl.u32 %v397, 7
    %v399 = vsub.s32 0, %v398
    %v400 = vrot.slane %v281, %v399
    %v401 = vlaneseq
    %v402 = vshrl.u32 %v401, 7
    %v403 = vsub.s32 0, %v402
    %v404 = vrot.slane %v288, %v403
    %v407 = vlaneseq
    %v408 = vshrl.u32 %v407, 7
    %v409 = vsub.s32 0, %v408
    %v410 = vrot.slane %v329, %v409
    %v411 = vlaneseq
    %v412 = vshrl.u32 %v411, 7
    %v413 = vsub.s32 0, %v412
    %v414 = vrot.slane %v336, %v413
    %vm417 = vcmask 1040384
    %v418 = vsel %vm417, 1.0, %v340
    %v419 = vsel %vm417, 1.0, %v344
    %v420 = vsel %vm32, %v418, %v350
    %v421 = vsel %vm32, %v419, %v354
    %vm422 = vcmask 1042432
    %v423 = vsel %vm422, %v420, %v360
    %v424 = vsel %vm422, %v421, %v364
    %vm425 = vcmask 1043456
    %v426 = vsel %vm425, %v423, %v370
    %v427 = vsel %vm425, %v424, %v374
    %vm428 = vcmask 1044480
    %v429 = vsel %vm428, %v426, %v380
    %v430 = vsel %vm428, %v427, %v384
    %vm431 = vcmask 1045504
    %v432 = vsel %vm431, %v429, %v390
    %v433 = vsel %vm431, %v430, %v394
    %vm434 = vcmask 1046528
    %v435 = vsel %vm434, %v432, %v400
    %v436 = vsel %vm434, %v433, %v404
    %v437 = vsel %vm417, %v304, %v410
    %v438 = vsel %vm417, %v311, %v414
    %v440 = vunpack.c.l.s4 1966171168
    %v441 = vunpack.c.0.s8 %v440
    %v442 = vlaneseq
    %v443 = vshrl.u32 %v442, 7
    %v444 = vsub.s32 %v441, %v443
    %v445 = vrot.slane %v109, %v444
    %v446 = vcombine.high %v445, %v445
    %v448 = vunpack.c.l.s4 1966171168
    %v449 = vunpack.c.0.s8 %v448
    %v450 = vlaneseq
    %v451 = vshrl.u32 %v450, 7
    %v452 = vsub.s32 %v449, %v451
    %v453 = vrot.slane %v445, %v452
    %v455 = vunpack.c.l.s4 1966171168
    %v456 = vunpack.c.0.s8 %v455
    %v457 = vlaneseq
    %v458 = vshrl.u32 %v457, 7
    %v459 = vsub.s32 %v456, %v458
    %v460 = vrot.slane %v446, %v459
    %v461 = vlaneseq
    %v462 = vshrl.u32 %v461, 7
    %v463 = vsub.s32 0, %v462
    %v464 = vrot.slane %v453, %v463
    %v465 = vlaneseq
    %v466 = vshrl.u32 %v465, 7
    %v467 = vsub.s32 0, %v466
    %v468 = vrot.slane %v460, %v467
    %vm469 = vcmp.eq.s32.totalorder %v464, %v41
    %vm470 = vcmp.eq.s32.totalorder %v464, %v42
    %vm471 = vcmp.eq.s32.totalorder %v464, %v43
    %vm472 = vcmp.eq.s32.totalorder %v464, %v44
    %vm473 = vcmp.eq.s32.totalorder %v464, %v45
    %vm474 = vcmp.eq.s32.totalorder %v464, %v46
    %vm475 = vcmp.eq.s32.totalorder %v464, %v47
    %vm476 = vcmp.eq.s32.totalorder %v464, %v48
    %vm477 = vcmp.eq.s32.totalorder %v468, %v41
    %vm478 = vcmp.eq.s32.totalorder %v468, %v42
    %vm479 = vcmp.eq.s32.totalorder %v468, %v43
    %vm480 = vcmp.eq.s32.totalorder %v468, %v44
    %vm481 = vcmp.eq.s32.totalorder %v468, %v45
    %vm482 = vcmp.eq.s32.totalorder %v468, %v46
    %vm483 = vcmp.eq.s32.totalorder %v468, %v47
    %vm484 = vcmp.eq.s32.totalorder %v468, %v48
    %v485 = vsel %vm469, 1, 0
    %v486 = vsel %vm470, 1, 0
    %v487 = vsel %vm471, 1, 0
    %v488 = vsel %vm472, 1, 0
    %v489 = vsel %vm473, 1, 0
    %v490 = vsel %vm474, 1, 0
    %v491 = vsel %vm475, 1, 0
    %v492 = vsel %vm476, 1, 0
    %v493 = vsel %vm477, 1, 0
    %v494 = vsel %vm478, 1, 0
    %v495 = vsel %vm479, 1, 0
    %v496 = vsel %vm480, 1, 0
    %v497 = vsel %vm481, 1, 0
    %v498 = vsel %vm482, 1, 0
    %v499 = vsel %vm483, 1, 0
    %v500 = vsel %vm484, 1, 0
    %v501 = vcvt.s32.f32 %v485
    %v502 = vcvt.s32.f32 %v486
    %v503 = vcvt.s32.f32 %v487
    %v504 = vcvt.s32.f32 %v488
    %v505 = vcvt.s32.f32 %v489
    %v506 = vcvt.s32.f32 %v490
    %v507 = vcvt.s32.f32 %v491
    %v508 = vcvt.s32.f32 %v492
    %v509 = vcvt.s32.f32 %v493
    %v510 = vcvt.s32.f32 %v494
    %v511 = vcvt.s32.f32 %v495
    %v512 = vcvt.s32.f32 %v496
    %v513 = vcvt.s32.f32 %v497
    %v514 = vcvt.s32.f32 %v498
    %v515 = vcvt.s32.f32 %v499
    %v516 = vcvt.s32.f32 %v500
    %v517 = vld [vmem:[%s1] sm:$0xff]
    %v518 = vld [vmem:[%s1 + $0x8] sm:$0xff]
    %v519 = vld [vmem:[%s1 + $0x10] sm:$0xff]
    %v520 = vld [vmem:[%s1 + $0x18] sm:$0xff]
    %v521 = vld [vmem:[%s1 + $0x20] sm:$0xff]
    %v522 = vld [vmem:[%s1 + $0x28] sm:$0xff]
    %v523 = vld [vmem:[%s1 + $0x30] sm:$0xff]
    %v524 = vld [vmem:[%s1 + $0x38] sm:$0xff]
    %v525 = vld [vmem:[%s1 + $0x40] sm:$0xff]
    %v526 = vld [vmem:[%s1 + $0x48] sm:$0xff]
    %v527 = vld [vmem:[%s1 + $0x50] sm:$0xff]
    %v528 = vld [vmem:[%s1 + $0x58] sm:$0xff]
    %v529 = vld [vmem:[%s1 + $0x60] sm:$0xff]
    %v530 = vld [vmem:[%s1 + $0x68] sm:$0xff]
    %v531 = vld [vmem:[%s1 + $0x70] sm:$0xff]
    %v532 = vld [vmem:[%s1 + $0x78] sm:$0xff]
    %533 = vmatprep.subr.mxu0 0.0
    %534 = vmatpush1.xpose.msra.mxu0 %v435
    %535 = vmatprep.subr.mxu0 0.0
    %536 = vmatpush1.xpose.msra.mxu0 %v437
    %537 = vmatprep.subr.mxu0 0.0
    %538 = vmatpush1.xpose.msra.mxu0 0.0
    %539 = vmatprep.subr.mxu0 0.0
    %540 = vmatpush1.xpose.msra.mxu0 0.0
    %541 = vmatprep.subr.mxu0 0.0
    %542 = vmatpush1.xpose.msra.mxu0 0.0
    %543 = vmatprep.subr.mxu0 0.0
    %544 = vmatpush1.xpose.msra.mxu0 0.0
    %545 = vmatprep.subr.mxu0 0.0
    %546 = vmatpush1.xpose.msra.mxu0 0.0
    %547 = vmatprep.subr.mxu0 0.0
    %548 = vmatpush1.xpose.msra.mxu0 0.0
    %549 = vmatprep.subr.mxu0 0.0
    %550 = vmatpush1.xpose.msra.mxu0 0.0
    %551 = vmatprep.subr.mxu0 0.0
    %552 = vmatpush1.xpose.msra.mxu0 0.0
    %553 = vmatprep.subr.mxu0 0.0
    %554 = vmatpush1.xpose.msra.mxu0 0.0
    %555 = vmatprep.subr.mxu0 0.0
    %556 = vmatpush1.xpose.msra.mxu0 0.0
    %557 = vmatprep.subr.mxu0 0.0
    %558 = vmatpush1.xpose.msra.mxu0 0.0
    %559 = vmatprep.subr.mxu0 0.0
    %560 = vmatpush1.xpose.msra.mxu0 0.0
    %561 = vmatprep.subr.mxu0 0.0
    %562 = vmatpush1.xpose.msra.mxu0 0.0
    %563 = vmatprep.subr.mxu0 0.0
    %564 = vmatpush1.xpose.msra.mxu0 0.0
    %565 = vmatprep.subr.mxu0 0.0
    %566 = vmatpush1.xpose.msra.mxu0 0.0
    %567 = vmatprep.subr.mxu0 0.0
    %568 = vmatpush1.xpose.msra.mxu0 0.0
    %569 = vmatprep.subr.mxu0 0.0
    %570 = vmatpush1.xpose.msra.mxu0 0.0
    %571 = vmatprep.subr.mxu0 0.0
    %572 = vmatpush1.xpose.msra.mxu0 0.0
    %573 = vmatprep.subr.mxu0 0.0
    %574 = vmatpush1.xpose.msra.mxu0 0.0
    %575 = vmatprep.subr.mxu0 0.0
    %576 = vmatpush1.xpose.msra.mxu0 0.0
    %577 = vmatprep.subr.mxu0 0.0
    %578 = vmatpush1.xpose.msra.mxu0 0.0
    %579 = vmatprep.subr.mxu0 0.0
    %580 = vmatpush1.xpose.msra.mxu0 0.0
    %581 = vmatprep.subr.mxu0 0.0
    %582 = vmatpush1.xpose.msra.mxu0 0.0
    %583 = vmatprep.subr.mxu0 0.0
    %584 = vmatpush1.xpose.msra.mxu0 0.0
    %585 = vmatprep.subr.mxu0 0.0
    %586 = vmatpush1.xpose.msra.mxu0 0.0
    %587 = vmatprep.subr.mxu0 0.0
    %588 = vmatpush1.xpose.msra.mxu0 0.0
    %589 = vmatprep.subr.mxu0 0.0
    %590 = vmatpush1.xpose.msra.mxu0 0.0
    %591 = vmatprep.subr.mxu0 0.0
    %592 = vmatpush1.xpose.msra.mxu0 0.0
    %593 = vmatprep.subr.mxu0 0.0
    %594 = vmatpush1.xpose.msra.mxu0 0.0
    %595 = vmatprep.subr.mxu0 0.0
    %596 = vmatpush1.xpose.msra.mxu0 0.0
    %597 = vmatprep.mubr.f32.mxu0 0.0
    %598 = vmatmul.mubr.f32.gmra.mrb[0].mxu0 %v501
    %v599 = vpop.f32.mrb[0].mxu0
    %v600 = vadd.f32 0.0, %v599
    %v601 = vpop.f32.mrb[0].mxu0
    %602 = vmatprep.mubr.f32.mxu0 0.0
    %603 = vmatmul.mubr.f32.gmra.mrb[0].mxu0 %v502
    %v604 = vpop.f32.mrb[0].mxu0
    %v605 = vadd.f32 0.0, %v604
    %v606 = vpop.f32.mrb[0].mxu0
    %607 = vmatprep.mubr.f32.mxu0 0.0
    %608 = vmatmul.mubr.f32.gmra.mrb[0].mxu0 %v503
    %v609 = vpop.f32.mrb[0].mxu0
    %v610 = vadd.f32 0.0, %v609
    %v611 = vpop.f32.mrb[0].mxu0
    %612 = vmatprep.mubr.f32.mxu0 0.0
    %613 = vmatmul.mubr.f32.gmra.mrb[0].mxu0 %v504
    %v614 = vpop.f32.mrb[0].mxu0
    %v615 = vadd.f32 0.0, %v614
    %v616 = vpop.f32.mrb[0].mxu0
    %617 = vmatprep.mubr.f32.mxu0 0.0
    %618 = vmatmul.mubr.f32.gmra.mrb[0].mxu0 %v505
    %v619 = vpop.f32.mrb[0].mxu0
    %v620 = vadd.f32 0.0, %v619
    %v621 = vpop.f32.mrb[0].mxu0
    %622 = vmatprep.mubr.f32.mxu0 0.0
    %623 = vmatmul.mubr.f32.gmra.mrb[0].mxu0 %v506
    %v624 = vpop.f32.mrb[0].mxu0
    %v625 = vadd.f32 0.0, %v624
    %v626 = vpop.f32.mrb[0].mxu0
    %627 = vmatprep.mubr.f32.mxu0 0.0
    %628 = vmatmul.mubr.f32.gmra.mrb[0].mxu0 %v507
    %v629 = vpop.f32.mrb[0].mxu0
    %v630 = vadd.f32 0.0, %v629
    %v631 = vpop.f32.mrb[0].mxu0
    %632 = vmatprep.mubr.f32.mxu0 0.0
    %633 = vmatmul.mubr.f32.gmra.mrb[0].mxu0 %v508
    %v634 = vpop.f32.mrb[0].mxu0
    %v635 = vadd.f32 0.0, %v634
    %v636 = vpop.f32.mrb[0].mxu0
    %637 = vdwg.mxu0
    %638 = vmatprep.subr.mxu0 0.0
    %639 = vmatpush1.xpose.msra.mxu0 %v436
    %640 = vmatprep.subr.mxu0 0.0
    %641 = vmatpush1.xpose.msra.mxu0 %v438
    %642 = vmatprep.subr.mxu0 0.0
    %643 = vmatpush1.xpose.msra.mxu0 0.0
    %644 = vmatprep.subr.mxu0 0.0
    %645 = vmatpush1.xpose.msra.mxu0 0.0
    %646 = vmatprep.subr.mxu0 0.0
    %647 = vmatpush1.xpose.msra.mxu0 0.0
    %648 = vmatprep.subr.mxu0 0.0
    %649 = vmatpush1.xpose.msra.mxu0 0.0
    %650 = vmatprep.subr.mxu0 0.0
    %651 = vmatpush1.xpose.msra.mxu0 0.0
    %652 = vmatprep.subr.mxu0 0.0
    %653 = vmatpush1.xpose.msra.mxu0 0.0
    %654 = vmatprep.subr.mxu0 0.0
    %655 = vmatpush1.xpose.msra.mxu0 0.0
    %656 = vmatprep.subr.mxu0 0.0
    %657 = vmatpush1.xpose.msra.mxu0 0.0
    %658 = vmatprep.subr.mxu0 0.0
    %659 = vmatpush1.xpose.msra.mxu0 0.0
    %660 = vmatprep.subr.mxu0 0.0
    %661 = vmatpush1.xpose.msra.mxu0 0.0
    %662 = vmatprep.subr.mxu0 0.0
    %663 = vmatpush1.xpose.msra.mxu0 0.0
    %664 = vmatprep.subr.mxu0 0.0
    %665 = vmatpush1.xpose.msra.mxu0 0.0
    %666 = vmatprep.subr.mxu0 0.0
    %667 = vmatpush1.xpose.msra.mxu0 0.0
    %668 = vmatprep.subr.mxu0 0.0
    %669 = vmatpush1.xpose.msra.mxu0 0.0
    %670 = vmatprep.subr.mxu0 0.0
    %671 = vmatpush1.xpose.msra.mxu0 0.0
    %672 = vmatprep.subr.mxu0 0.0
    %673 = vmatpush1.xpose.msra.mxu0 0.0
    %674 = vmatprep.subr.mxu0 0.0
    %675 = vmatpush1.xpose.msra.mxu0 0.0
    %676 = vmatprep.subr.mxu0 0.0
    %677 = vmatpush1.xpose.msra.mxu0 0.0
    %678 = vmatprep.subr.mxu0 0.0
    %679 = vmatpush1.xpose.msra.mxu0 0.0
    %680 = vmatprep.subr.mxu0 0.0
    %681 = vmatpush1.xpose.msra.mxu0 0.0
    %682 = vmatprep.subr.mxu0 0.0
    %683 = vmatpush1.xpose.msra.mxu0 0.0
    %684 = vmatprep.subr.mxu0 0.0
    %685 = vmatpush1.xpose.msra.mxu0 0.0
    %686 = vmatprep.subr.mxu0 0.0
    %687 = vmatpush1.xpose.msra.mxu0 0.0
    %688 = vmatprep.subr.mxu0 0.0
    %689 = vmatpush1.xpose.msra.mxu0 0.0
    %690 = vmatprep.subr.mxu0 0.0
    %691 = vmatpush1.xpose.msra.mxu0 0.0
    %692 = vmatprep.subr.mxu0 0.0
    %693 = vmatpush1.xpose.msra.mxu0 0.0
    %694 = vmatprep.subr.mxu0 0.0
    %695 = vmatpush1.xpose.msra.mxu0 0.0
    %696 = vmatprep.subr.mxu0 0.0
    %697 = vmatpush1.xpose.msra.mxu0 0.0
    %698 = vmatprep.subr.mxu0 0.0
    %699 = vmatpush1.xpose.msra.mxu0 0.0
    %700 = vmatprep.subr.mxu0 0.0
    %701 = vmatpush1.xpose.msra.mxu0 0.0
    %702 = vmatprep.mubr.f32.mxu0 0.0
    %703 = vmatmul.mubr.f32.gmra.mrb[0].mxu0 %v509
    %v704 = vpop.f32.mrb[0].mxu0
    %v705 = vadd.f32 0.0, %v704
    %v706 = vpop.f32.mrb[0].mxu0
    %707 = vmatprep.mubr.f32.mxu0 0.0
    %708 = vmatmul.mubr.f32.gmra.mrb[0].mxu0 %v510
    %v709 = vpop.f32.mrb[0].mxu0
    %v710 = vadd.f32 0.0, %v709
    %v711 = vpop.f32.mrb[0].mxu0
    %712 = vmatprep.mubr.f32.mxu0 0.0
    %713 = vmatmul.mubr.f32.gmra.mrb[0].mxu0 %v511
    %v714 = vpop.f32.mrb[0].mxu0
    %v715 = vadd.f32 0.0, %v714
    %v716 = vpop.f32.mrb[0].mxu0
    %717 = vmatprep.mubr.f32.mxu0 0.0
    %718 = vmatmul.mubr.f32.gmra.mrb[0].mxu0 %v512
    %v719 = vpop.f32.mrb[0].mxu0
    %v720 = vadd.f32 0.0, %v719
    %v721 = vpop.f32.mrb[0].mxu0
    %722 = vmatprep.mubr.f32.mxu0 0.0
    %723 = vmatmul.mubr.f32.gmra.mrb[0].mxu0 %v513
    %v724 = vpop.f32.mrb[0].mxu0
    %v725 = vadd.f32 0.0, %v724
    %v726 = vpop.f32.mrb[0].mxu0
    %727 = vmatprep.mubr.f32.mxu0 0.0
    %728 = vmatmul.mubr.f32.gmra.mrb[0].mxu0 %v514
    %v729 = vpop.f32.mrb[0].mxu0
    %v730 = vadd.f32 0.0, %v729
    %v731 = vpop.f32.mrb[0].mxu0
    %732 = vmatprep.mubr.f32.mxu0 0.0
    %733 = vmatmul.mubr.f32.gmra.mrb[0].mxu0 %v515
    %v734 = vpop.f32.mrb[0].mxu0
    %v735 = vadd.f32 0.0, %v734
    %v736 = vpop.f32.mrb[0].mxu0
    %737 = vmatprep.mubr.f32.mxu0 0.0
    %738 = vmatmul.mubr.f32.gmra.mrb[0].mxu0 %v516
    %v739 = vpop.f32.mrb[0].mxu0
    %v740 = vadd.f32 0.0, %v739
    %v741 = vpop.f32.mrb[0].mxu0
    %742 = vdwg.mxu0
    %v743 = vadd.f32 %v517, %v600
    %v744 = vadd.f32 %v518, %v605
    %v745 = vadd.f32 %v519, %v610
    %v746 = vadd.f32 %v520, %v615
    %v747 = vadd.f32 %v521, %v620
    %v748 = vadd.f32 %v522, %v625
    %v749 = vadd.f32 %v523, %v630
    %v750 = vadd.f32 %v524, %v635
    %v751 = vadd.f32 %v525, %v705
    %v752 = vadd.f32 %v526, %v710
    %v753 = vadd.f32 %v527, %v715
    %v754 = vadd.f32 %v528, %v720
    %v755 = vadd.f32 %v529, %v725
    %v756 = vadd.f32 %v530, %v730
    %v757 = vadd.f32 %v531, %v735
    %v758 = vadd.f32 %v532, %v740
    %759 = vst.msk [vmem:[%s1] sm:$0xff] %vm49, %v743
    %760 = vst.msk [vmem:[%s1 + $0x8] sm:$0xff] %vm49, %v744
    %761 = vst.msk [vmem:[%s1 + $0x10] sm:$0xff] %vm49, %v745
    %762 = vst.msk [vmem:[%s1 + $0x18] sm:$0xff] %vm49, %v746
    %763 = vst.msk [vmem:[%s1 + $0x20] sm:$0xff] %vm49, %v747
    %764 = vst.msk [vmem:[%s1 + $0x28] sm:$0xff] %vm49, %v748
    %765 = vst.msk [vmem:[%s1 + $0x30] sm:$0xff] %vm49, %v749
    %766 = vst.msk [vmem:[%s1 + $0x38] sm:$0xff] %vm49, %v750
    %767 = vst.msk [vmem:[%s1 + $0x40] sm:$0xff] %vm49, %v751
    %768 = vst.msk [vmem:[%s1 + $0x48] sm:$0xff] %vm49, %v752
    %769 = vst.msk [vmem:[%s1 + $0x50] sm:$0xff] %vm49, %v753
    %770 = vst.msk [vmem:[%s1 + $0x58] sm:$0xff] %vm49, %v754
    %771 = vst.msk [vmem:[%s1 + $0x60] sm:$0xff] %vm49, %v755
    %772 = vst.msk [vmem:[%s1 + $0x68] sm:$0xff] %vm49, %v756
    %773 = vst.msk [vmem:[%s1 + $0x70] sm:$0xff] %vm49, %v757
    %774 = vst.msk [vmem:[%s1 + $0x78] sm:$0xff] %vm49, %v758
    %v775 = vld [vmem:[%s1] sm:$0xff]
    %v776 = vld [vmem:[%s1 + $0x8] sm:$0xff]
    %v777 = vld [vmem:[%s1 + $0x10] sm:$0xff]
    %v778 = vld [vmem:[%s1 + $0x18] sm:$0xff]
    %v779 = vld [vmem:[%s1 + $0x20] sm:$0xff]
    %v780 = vld [vmem:[%s1 + $0x28] sm:$0xff]
    %v781 = vld [vmem:[%s1 + $0x30] sm:$0xff]
    %v782 = vld [vmem:[%s1 + $0x38] sm:$0xff]
    %v783 = vld [vmem:[%s1 + $0x40] sm:$0xff]
    %v784 = vld [vmem:[%s1 + $0x48] sm:$0xff]
    %v785 = vld [vmem:[%s1 + $0x50] sm:$0xff]
    %v786 = vld [vmem:[%s1 + $0x58] sm:$0xff]
    %v787 = vld [vmem:[%s1 + $0x60] sm:$0xff]
    %v788 = vld [vmem:[%s1 + $0x68] sm:$0xff]
    %v789 = vld [vmem:[%s1 + $0x70] sm:$0xff]
    %v790 = vld [vmem:[%s1 + $0x78] sm:$0xff]
    %v791 = vmax.f32 %v775, 1.0
    %v792 = vmax.f32 %v776, 1.0
    %v793 = vmax.f32 %v777, 1.0
    %v794 = vmax.f32 %v778, 1.0
    %v795 = vmax.f32 %v779, 1.0
    %v796 = vmax.f32 %v780, 1.0
    %v797 = vmax.f32 %v781, 1.0
    %v798 = vmax.f32 %v782, 1.0
    %v799 = vmax.f32 %v783, 1.0
    %v800 = vmax.f32 %v784, 1.0
    %v801 = vmax.f32 %v785, 1.0
    %v802 = vmax.f32 %v786, 1.0
    %v803 = vmax.f32 %v787, 1.0
    %v804 = vmax.f32 %v788, 1.0
    %v805 = vmax.f32 %v789, 1.0
    %v806 = vmax.f32 %v790, 1.0
    %v807 = vrsqrt.pop %v791
    %v808 = vmul.f32 %v791, %v807
    %vm809 = vcmp.eq.f32.partialorder %v791, inf
    %v810 = vsel %vm809, %v791, %v808
    %vm811 = vcmp.eq.f32.partialorder %v791, 0.0
    %v812 = vand.u32 %v791, 2147483648
    %v813 = vsel %vm811, %v812, %v810
    %v814 = vrsqrt.pop %v792
    %v815 = vmul.f32 %v792, %v814
    %vm816 = vcmp.eq.f32.partialorder %v792, inf
    %v817 = vsel %vm816, %v792, %v815
    %vm818 = vcmp.eq.f32.partialorder %v792, 0.0
    %v819 = vand.u32 %v792, 2147483648
    %v820 = vsel %vm818, %v819, %v817
    %v821 = vrsqrt.pop %v793
    %v822 = vmul.f32 %v793, %v821
    %vm823 = vcmp.eq.f32.partialorder %v793, inf
    %v824 = vsel %vm823, %v793, %v822
    %vm825 = vcmp.eq.f32.partialorder %v793, 0.0
    %v826 = vand.u32 %v793, 2147483648
    %v827 = vsel %vm825, %v826, %v824
    %v828 = vrsqrt.pop %v794
    %v829 = vmul.f32 %v794, %v828
    %vm830 = vcmp.eq.f32.partialorder %v794, inf
    %v831 = vsel %vm830, %v794, %v829
    %vm832 = vcmp.eq.f32.partialorder %v794, 0.0
    %v833 = vand.u32 %v794, 2147483648
    %v834 = vsel %vm832, %v833, %v831
    %v835 = vrsqrt.pop %v795
    %v836 = vmul.f32 %v795, %v835
    %vm837 = vcmp.eq.f32.partialorder %v795, inf
    %v838 = vsel %vm837, %v795, %v836
    %vm839 = vcmp.eq.f32.partialorder %v795, 0.0
    %v840 = vand.u32 %v795, 2147483648
    %v841 = vsel %vm839, %v840, %v838
    %v842 = vrsqrt.pop %v796
    %v843 = vmul.f32 %v796, %v842
    %vm844 = vcmp.eq.f32.partialorder %v796, inf
    %v845 = vsel %vm844, %v796, %v843
    %vm846 = vcmp.eq.f32.partialorder %v796, 0.0
    %v847 = vand.u32 %v796, 2147483648
    %v848 = vsel %vm846, %v847, %v845
    %v849 = vrsqrt.pop %v797
    %v850 = vmul.f32 %v797, %v849
    %vm851 = vcmp.eq.f32.partialorder %v797, inf
    %v852 = vsel %vm851, %v797, %v850
    %vm853 = vcmp.eq.f32.partialorder %v797, 0.0
    %v854 = vand.u32 %v797, 2147483648
    %v855 = vsel %vm853, %v854, %v852
    %v856 = vrsqrt.pop %v798
    %v857 = vmul.f32 %v798, %v856
    %vm858 = vcmp.eq.f32.partialorder %v798, inf
    %v859 = vsel %vm858, %v798, %v857
    %vm860 = vcmp.eq.f32.partialorder %v798, 0.0
    %v861 = vand.u32 %v798, 2147483648
    %v862 = vsel %vm860, %v861, %v859
    %v863 = vrsqrt.pop %v799
    %v864 = vmul.f32 %v799, %v863
    %vm865 = vcmp.eq.f32.partialorder %v799, inf
    %v866 = vsel %vm865, %v799, %v864
    %vm867 = vcmp.eq.f32.partialorder %v799, 0.0
    %v868 = vand.u32 %v799, 2147483648
    %v869 = vsel %vm867, %v868, %v866
    %v870 = vrsqrt.pop %v800
    %v871 = vmul.f32 %v800, %v870
    %vm872 = vcmp.eq.f32.partialorder %v800, inf
    %v873 = vsel %vm872, %v800, %v871
    %vm874 = vcmp.eq.f32.partialorder %v800, 0.0
    %v875 = vand.u32 %v800, 2147483648
    %v876 = vsel %vm874, %v875, %v873
    %v877 = vrsqrt.pop %v801
    %v878 = vmul.f32 %v801, %v877
    %vm879 = vcmp.eq.f32.partialorder %v801, inf
    %v880 = vsel %vm879, %v801, %v878
    %vm881 = vcmp.eq.f32.partialorder %v801, 0.0
    %v882 = vand.u32 %v801, 2147483648
    %v883 = vsel %vm881, %v882, %v880
    %v884 = vrsqrt.pop %v802
    %v885 = vmul.f32 %v802, %v884
    %vm886 = vcmp.eq.f32.partialorder %v802, inf
    %v887 = vsel %vm886, %v802, %v885
    %vm888 = vcmp.eq.f32.partialorder %v802, 0.0
    %v889 = vand.u32 %v802, 2147483648
    %v890 = vsel %vm888, %v889, %v887
    %v891 = vrsqrt.pop %v803
    %v892 = vmul.f32 %v803, %v891
    %vm893 = vcmp.eq.f32.partialorder %v803, inf
    %v894 = vsel %vm893, %v803, %v892
    %vm895 = vcmp.eq.f32.partialorder %v803, 0.0
    %v896 = vand.u32 %v803, 2147483648
    %v897 = vsel %vm895, %v896, %v894
    %v898 = vrsqrt.pop %v804
    %v899 = vmul.f32 %v804, %v898
    %vm900 = vcmp.eq.f32.partialorder %v804, inf
    %v901 = vsel %vm900, %v804, %v899
    %vm902 = vcmp.eq.f32.partialorder %v804, 0.0
    %v903 = vand.u32 %v804, 2147483648
    %v904 = vsel %vm902, %v903, %v901
    %v905 = vrsqrt.pop %v805
    %v906 = vmul.f32 %v805, %v905
    %vm907 = vcmp.eq.f32.partialorder %v805, inf
    %v908 = vsel %vm907, %v805, %v906
    %vm909 = vcmp.eq.f32.partialorder %v805, 0.0
    %v910 = vand.u32 %v805, 2147483648
    %v911 = vsel %vm909, %v910, %v908
    %v912 = vrsqrt.pop %v806
    %v913 = vmul.f32 %v806, %v912
    %vm914 = vcmp.eq.f32.partialorder %v806, inf
    %v915 = vsel %vm914, %v806, %v913
    %vm916 = vcmp.eq.f32.partialorder %v806, 0.0
    %v917 = vand.u32 %v806, 2147483648
    %v918 = vsel %vm916, %v917, %v915
    %v919 = vrcp.pop %v813
    %v920 = vmul.f32 1.0, %v919
    %v921 = vrcp.pop %v820
    %v922 = vmul.f32 1.0, %v921
    %v923 = vrcp.pop %v827
    %v924 = vmul.f32 1.0, %v923
    %v925 = vrcp.pop %v834
    %v926 = vmul.f32 1.0, %v925
    %v927 = vrcp.pop %v841
    %v928 = vmul.f32 1.0, %v927
    %v929 = vrcp.pop %v848
    %v930 = vmul.f32 1.0, %v929
    %v931 = vrcp.pop %v855
    %v932 = vmul.f32 1.0, %v931
    %v933 = vrcp.pop %v862
    %v934 = vmul.f32 1.0, %v933
    %v935 = vrcp.pop %v869
    %v936 = vmul.f32 1.0, %v935
    %v937 = vrcp.pop %v876
    %v938 = vmul.f32 1.0, %v937
    %v939 = vrcp.pop %v883
    %v940 = vmul.f32 1.0, %v939
    %v941 = vrcp.pop %v890
    %v942 = vmul.f32 1.0, %v941
    %v943 = vrcp.pop %v897
    %v944 = vmul.f32 1.0, %v943
    %v945 = vrcp.pop %v904
    %v946 = vmul.f32 1.0, %v945
    %v947 = vrcp.pop %v911
    %v948 = vmul.f32 1.0, %v947
    %v949 = vrcp.pop %v918
    %v950 = vmul.f32 1.0, %v949
    %v951 = vmul.f32 %v775, 0.001
    %v952 = vmul.f32 %v776, 0.001
    %v953 = vmul.f32 %v777, 0.001
    %v954 = vmul.f32 %v778, 0.001
    %v955 = vmul.f32 %v779, 0.001
    %v956 = vmul.f32 %v780, 0.001
    %v957 = vmul.f32 %v781, 0.001
    %v958 = vmul.f32 %v782, 0.001
    %v959 = vmul.f32 %v783, 0.001
    %v960 = vmul.f32 %v784, 0.001
    %v961 = vmul.f32 %v785, 0.001
    %v962 = vmul.f32 %v786, 0.001
    %v963 = vmul.f32 %v787, 0.001
    %v964 = vmul.f32 %v788, 0.001
    %v965 = vmul.f32 %v789, 0.001
    %v966 = vmul.f32 %v790, 0.001
    %v967 = vmul.f32 %v951, %v920
    %v968 = vmul.f32 %v952, %v922
    %v969 = vmul.f32 %v953, %v924
    %v970 = vmul.f32 %v954, %v926
    %v971 = vmul.f32 %v955, %v928
    %v972 = vmul.f32 %v956, %v930
    %v973 = vmul.f32 %v957, %v932
    %v974 = vmul.f32 %v958, %v934
    %v975 = vmul.f32 %v959, %v936
    %v976 = vmul.f32 %v960, %v938
    %v977 = vmul.f32 %v961, %v940
    %v978 = vmul.f32 %v962, %v942
    %v979 = vmul.f32 %v963, %v944
    %v980 = vmul.f32 %v964, %v946
    %v981 = vmul.f32 %v965, %v948
    %v982 = vmul.f32 %v966, %v950
    %984 = vset.pattern.permute.xlu0 0
    %985 = vperm.xlu0 %984, %v920
    %v986 = vpop.permute.xlu0 %985
    %989 = vset.pattern.permute.xlu0 0
    %990 = vperm.xlu0 %989, %v922
    %v991 = vpop.permute.xlu0 %990
    %994 = vset.pattern.permute.xlu0 0
    %995 = vperm.xlu0 %994, %v924
    %v996 = vpop.permute.xlu0 %995
    %999 = vset.pattern.permute.xlu0 0
    %1000 = vperm.xlu0 %999, %v926
    %v1001 = vpop.permute.xlu0 %1000
    %1004 = vset.pattern.permute.xlu0 0
    %1005 = vperm.xlu0 %1004, %v928
    %v1006 = vpop.permute.xlu0 %1005
    %1009 = vset.pattern.permute.xlu0 0
    %1010 = vperm.xlu0 %1009, %v930
    %v1011 = vpop.permute.xlu0 %1010
    %1014 = vset.pattern.permute.xlu0 0
    %1015 = vperm.xlu0 %1014, %v932
    %v1016 = vpop.permute.xlu0 %1015
    %1019 = vset.pattern.permute.xlu0 0
    %1020 = vperm.xlu0 %1019, %v934
    %v1021 = vpop.permute.xlu0 %1020
    %1024 = vset.pattern.permute.xlu0 0
    %1025 = vperm.xlu0 %1024, %v936
    %v1026 = vpop.permute.xlu0 %1025
    %1029 = vset.pattern.permute.xlu0 0
    %1030 = vperm.xlu0 %1029, %v938
    %v1031 = vpop.permute.xlu0 %1030
    %1034 = vset.pattern.permute.xlu0 0
    %1035 = vperm.xlu0 %1034, %v940
    %v1036 = vpop.permute.xlu0 %1035
    %1039 = vset.pattern.permute.xlu0 0
    %1040 = vperm.xlu0 %1039, %v942
    %v1041 = vpop.permute.xlu0 %1040
    %1044 = vset.pattern.permute.xlu0 0
    %1045 = vperm.xlu0 %1044, %v944
    %v1046 = vpop.permute.xlu0 %1045
    %1049 = vset.pattern.permute.xlu0 0
    %1050 = vperm.xlu0 %1049, %v946
    %v1051 = vpop.permute.xlu0 %1050
    %1054 = vset.pattern.permute.xlu0 0
    %1055 = vperm.xlu0 %1054, %v948
    %v1056 = vpop.permute.xlu0 %1055
    %1059 = vset.pattern.permute.xlu0 0
    %1060 = vperm.xlu0 %1059, %v950
    %v1061 = vpop.permute.xlu0 %1060
    %v1063 = vmul.f32 %v775, %v986
    %v1064 = vmul.f32 %v776, %v991
    %v1065 = vmul.f32 %v777, %v996
    %v1066 = vmul.f32 %v778, %v1001
    %v1067 = vmul.f32 %v779, %v1006
    %v1068 = vmul.f32 %v780, %v1011
    %v1069 = vmul.f32 %v781, %v1016
    %v1070 = vmul.f32 %v782, %v1021
    %v1071 = vmul.f32 %v783, %v1026
    %v1072 = vmul.f32 %v784, %v1031
    %v1073 = vmul.f32 %v785, %v1036
    %v1074 = vmul.f32 %v786, %v1041
    %v1075 = vmul.f32 %v787, %v1046
    %v1076 = vmul.f32 %v788, %v1051
    %v1077 = vmul.f32 %v789, %v1056
    %v1078 = vmul.f32 %v790, %v1061
    %1080 = vset.pattern.permute.xlu0 0
    %1081 = vperm.xlu0 %1080, %v791
    %v1082 = vpop.permute.xlu0 %1081
    %1085 = vset.pattern.permute.xlu0 0
    %1086 = vperm.xlu0 %1085, %v792
    %v1087 = vpop.permute.xlu0 %1086
    %1090 = vset.pattern.permute.xlu0 0
    %1091 = vperm.xlu0 %1090, %v793
    %v1092 = vpop.permute.xlu0 %1091
    %1095 = vset.pattern.permute.xlu0 0
    %1096 = vperm.xlu0 %1095, %v794
    %v1097 = vpop.permute.xlu0 %1096
    %1100 = vset.pattern.permute.xlu0 0
    %1101 = vperm.xlu0 %1100, %v795
    %v1102 = vpop.permute.xlu0 %1101
    %1105 = vset.pattern.permute.xlu0 0
    %1106 = vperm.xlu0 %1105, %v796
    %v1107 = vpop.permute.xlu0 %1106
    %1110 = vset.pattern.permute.xlu0 0
    %1111 = vperm.xlu0 %1110, %v797
    %v1112 = vpop.permute.xlu0 %1111
    %1115 = vset.pattern.permute.xlu0 0
    %1116 = vperm.xlu0 %1115, %v798
    %v1117 = vpop.permute.xlu0 %1116
    %1120 = vset.pattern.permute.xlu0 0
    %1121 = vperm.xlu0 %1120, %v799
    %v1122 = vpop.permute.xlu0 %1121
    %1125 = vset.pattern.permute.xlu0 0
    %1126 = vperm.xlu0 %1125, %v800
    %v1127 = vpop.permute.xlu0 %1126
    %1130 = vset.pattern.permute.xlu0 0
    %1131 = vperm.xlu0 %1130, %v801
    %v1132 = vpop.permute.xlu0 %1131
    %1135 = vset.pattern.permute.xlu0 0
    %1136 = vperm.xlu0 %1135, %v802
    %v1137 = vpop.permute.xlu0 %1136
    %1140 = vset.pattern.permute.xlu0 0
    %1141 = vperm.xlu0 %1140, %v803
    %v1142 = vpop.permute.xlu0 %1141
    %1145 = vset.pattern.permute.xlu0 0
    %1146 = vperm.xlu0 %1145, %v804
    %v1147 = vpop.permute.xlu0 %1146
    %1150 = vset.pattern.permute.xlu0 0
    %1151 = vperm.xlu0 %1150, %v805
    %v1152 = vpop.permute.xlu0 %1151
    %1155 = vset.pattern.permute.xlu0 0
    %1156 = vperm.xlu0 %1155, %v806
    %v1157 = vpop.permute.xlu0 %1156
    %v1159 = vrcp.pop %v1082
    %v1160 = vmul.f32 %v775, %v1159
    %v1161 = vrcp.pop %v1087
    %v1162 = vmul.f32 %v776, %v1161
    %v1163 = vrcp.pop %v1092
    %v1164 = vmul.f32 %v777, %v1163
    %v1165 = vrcp.pop %v1097
    %v1166 = vmul.f32 %v778, %v1165
    %v1167 = vrcp.pop %v1102
    %v1168 = vmul.f32 %v779, %v1167
    %v1169 = vrcp.pop %v1107
    %v1170 = vmul.f32 %v780, %v1169
    %v1171 = vrcp.pop %v1112
    %v1172 = vmul.f32 %v781, %v1171
    %v1173 = vrcp.pop %v1117
    %v1174 = vmul.f32 %v782, %v1173
    %v1175 = vrcp.pop %v1122
    %v1176 = vmul.f32 %v783, %v1175
    %v1177 = vrcp.pop %v1127
    %v1178 = vmul.f32 %v784, %v1177
    %v1179 = vrcp.pop %v1132
    %v1180 = vmul.f32 %v785, %v1179
    %v1181 = vrcp.pop %v1137
    %v1182 = vmul.f32 %v786, %v1181
    %v1183 = vrcp.pop %v1142
    %v1184 = vmul.f32 %v787, %v1183
    %v1185 = vrcp.pop %v1147
    %v1186 = vmul.f32 %v788, %v1185
    %v1187 = vrcp.pop %v1152
    %v1188 = vmul.f32 %v789, %v1187
    %v1189 = vrcp.pop %v1157
    %v1190 = vmul.f32 %v790, %v1189
    %vm1191 = vcmask 7168
    %v1192 = vsel %vm1191, %v967, %v1063
    %v1193 = vsel %vm1191, %v968, %v1064
    %v1194 = vsel %vm1191, %v969, %v1065
    %v1195 = vsel %vm1191, %v970, %v1066
    %v1196 = vsel %vm1191, %v971, %v1067
    %v1197 = vsel %vm1191, %v972, %v1068
    %v1198 = vsel %vm1191, %v973, %v1069
    %v1199 = vsel %vm1191, %v974, %v1070
    %v1200 = vsel %vm1191, %v975, %v1071
    %v1201 = vsel %vm1191, %v976, %v1072
    %v1202 = vsel %vm1191, %v977, %v1073
    %v1203 = vsel %vm1191, %v978, %v1074
    %v1204 = vsel %vm1191, %v979, %v1075
    %v1205 = vsel %vm1191, %v980, %v1076
    %v1206 = vsel %vm1191, %v981, %v1077
    %v1207 = vsel %vm1191, %v982, %v1078
    %vm1208 = vcmask 31744
    %v1209 = vsel %vm1208, %v1192, %v1160
    %v1210 = vsel %vm1208, %v1193, %v1162
    %v1211 = vsel %vm1208, %v1194, %v1164
    %v1212 = vsel %vm1208, %v1195, %v1166
    %v1213 = vsel %vm1208, %v1196, %v1168
    %v1214 = vsel %vm1208, %v1197, %v1170
    %v1215 = vsel %vm1208, %v1198, %v1172
    %v1216 = vsel %vm1208, %v1199, %v1174
    %v1217 = vsel %vm1208, %v1200, %v1176
    %v1218 = vsel %vm1208, %v1201, %v1178
    %v1219 = vsel %vm1208, %v1202, %v1180
    %v1220 = vsel %vm1208, %v1203, %v1182
    %v1221 = vsel %vm1208, %v1204, %v1184
    %v1222 = vsel %vm1208, %v1205, %v1186
    %v1223 = vsel %vm1208, %v1206, %v1188
    %v1224 = vsel %vm1208, %v1207, %v1190
    %v1225 = vmul.f32 %v1209, %v1209
    %v1226 = vmul.f32 %v1210, %v1210
    %v1227 = vmul.f32 %v1211, %v1211
    %v1228 = vmul.f32 %v1212, %v1212
    %v1229 = vmul.f32 %v1213, %v1213
    %v1230 = vmul.f32 %v1214, %v1214
    %v1231 = vmul.f32 %v1215, %v1215
    %v1232 = vmul.f32 %v1216, %v1216
    %v1233 = vmul.f32 %v1217, %v1217
    %v1234 = vmul.f32 %v1218, %v1218
    %v1235 = vmul.f32 %v1219, %v1219
    %v1236 = vmul.f32 %v1220, %v1220
    %v1237 = vmul.f32 %v1221, %v1221
    %v1238 = vmul.f32 %v1222, %v1222
    %v1239 = vmul.f32 %v1223, %v1223
    %v1240 = vmul.f32 %v1224, %v1224
    %v1241 = vsel %vm49, %v1225, 0.0
    %1242 = vadd.xlane.f32.xlu0 %v1241
    %v1243 = vpop.xlane.xlu0 %1242
    %v1244 = vsel %vm49, %v1226, 0.0
    %1245 = vadd.xlane.f32.xlu0 %v1244
    %v1246 = vpop.xlane.xlu0 %1245
    %v1247 = vsel %vm49, %v1227, 0.0
    %1248 = vadd.xlane.f32.xlu0 %v1247
    %v1249 = vpop.xlane.xlu0 %1248
    %v1250 = vsel %vm49, %v1228, 0.0
    %1251 = vadd.xlane.f32.xlu0 %v1250
    %v1252 = vpop.xlane.xlu0 %1251
    %v1253 = vsel %vm49, %v1229, 0.0
    %1254 = vadd.xlane.f32.xlu0 %v1253
    %v1255 = vpop.xlane.xlu0 %1254
    %v1256 = vsel %vm49, %v1230, 0.0
    %1257 = vadd.xlane.f32.xlu0 %v1256
    %v1258 = vpop.xlane.xlu0 %1257
    %v1259 = vsel %vm49, %v1231, 0.0
    %1260 = vadd.xlane.f32.xlu0 %v1259
    %v1261 = vpop.xlane.xlu0 %1260
    %v1262 = vsel %vm49, %v1232, 0.0
    %1263 = vadd.xlane.f32.xlu0 %v1262
    %v1264 = vpop.xlane.xlu0 %1263
    %v1265 = vsel %vm49, %v1233, 0.0
    %1266 = vadd.xlane.f32.xlu0 %v1265
    %v1267 = vpop.xlane.xlu0 %1266
    %v1268 = vsel %vm49, %v1234, 0.0
    %1269 = vadd.xlane.f32.xlu0 %v1268
    %v1270 = vpop.xlane.xlu0 %1269
    %v1271 = vsel %vm49, %v1235, 0.0
    %1272 = vadd.xlane.f32.xlu0 %v1271
    %v1273 = vpop.xlane.xlu0 %1272
    %v1274 = vsel %vm49, %v1236, 0.0
    %1275 = vadd.xlane.f32.xlu0 %v1274
    %v1276 = vpop.xlane.xlu0 %1275
    %v1277 = vsel %vm49, %v1237, 0.0
    %1278 = vadd.xlane.f32.xlu0 %v1277
    %v1279 = vpop.xlane.xlu0 %1278
    %v1280 = vsel %vm49, %v1238, 0.0
    %1281 = vadd.xlane.f32.xlu0 %v1280
    %v1282 = vpop.xlane.xlu0 %1281
    %v1283 = vsel %vm49, %v1239, 0.0
    %1284 = vadd.xlane.f32.xlu0 %v1283
    %v1285 = vpop.xlane.xlu0 %1284
    %v1286 = vsel %vm49, %v1240, 0.0
    %1287 = vadd.xlane.f32.xlu0 %v1286
    %v1288 = vpop.xlane.xlu0 %1287
    %v1289 = vadd.f32 %v1243, %v1246
    %v1290 = vadd.f32 %v1289, %v1249
    %v1291 = vadd.f32 %v1290, %v1252
    %v1292 = vadd.f32 %v1291, %v1255
    %v1293 = vadd.f32 %v1292, %v1258
    %v1294 = vadd.f32 %v1293, %v1261
    %v1295 = vadd.f32 %v1294, %v1264
    %v1296 = vrot.slane %v1295, 4
    %v1297 = vadd.f32 %v1295, %v1296
    %v1298 = vrot.slane %v1297, 2
    %v1299 = vadd.f32 %v1297, %v1298
    %v1300 = vrot.slane %v1299, 1
    %v1301 = vadd.f32 %v1299, %v1300
    %v1302 = vadd.f32 %v1267, %v1270
    %v1303 = vadd.f32 %v1302, %v1273
    %v1304 = vadd.f32 %v1303, %v1276
    %v1305 = vadd.f32 %v1304, %v1279
    %v1306 = vadd.f32 %v1305, %v1282
    %v1307 = vadd.f32 %v1306, %v1285
    %v1308 = vadd.f32 %v1307, %v1288
    %v1309 = vrot.slane %v1308, 4
    %v1310 = vadd.f32 %v1308, %v1309
    %v1311 = vrot.slane %v1310, 2
    %v1312 = vadd.f32 %v1310, %v1311
    %v1313 = vrot.slane %v1312, 1
    %v1314 = vadd.f32 %v1312, %v1313
    %v1315 = vrsqrt.pop %v1301
    %v1316 = vmul.f32 %v1301, %v1315
    %vm1317 = vcmp.eq.f32.partialorder %v1301, inf
    %v1318 = vsel %vm1317, %v1301, %v1316
    %vm1319 = vcmp.eq.f32.partialorder %v1301, 0.0
    %v1320 = vand.u32 %v1301, 2147483648
    %v1321 = vsel %vm1319, %v1320, %v1318
    %v1322 = vrsqrt.pop %v1314
    %v1323 = vmul.f32 %v1314, %v1322
    %vm1324 = vcmp.eq.f32.partialorder %v1314, inf
    %v1325 = vsel %vm1324, %v1314, %v1323
    %vm1326 = vcmp.eq.f32.partialorder %v1314, 0.0
    %v1327 = vand.u32 %v1314, 2147483648
    %v1328 = vsel %vm1326, %v1327, %v1325
    %v1329 = vmax.f32 %v1321, 1e-12
    %v1330 = vmax.f32 %v1328, 1e-12
    %v1331 = vrcp.pop %v1329
    %v1332 = vmul.f32 1.0, %v1331
    %v1333 = vrcp.pop %v1330
    %v1334 = vmul.f32 1.0, %v1333
    %v1335 = vmul.f32 %v1209, %v1332
    %v1336 = vmul.f32 %v1210, %v1332
    %v1337 = vmul.f32 %v1211, %v1332
    %v1338 = vmul.f32 %v1212, %v1332
    %v1339 = vmul.f32 %v1213, %v1332
    %v1340 = vmul.f32 %v1214, %v1332
    %v1341 = vmul.f32 %v1215, %v1332
    %v1342 = vmul.f32 %v1216, %v1332
    %v1343 = vmul.f32 %v1217, %v1334
    %v1344 = vmul.f32 %v1218, %v1334
    %v1345 = vmul.f32 %v1219, %v1334
    %v1346 = vmul.f32 %v1220, %v1334
    %v1347 = vmul.f32 %v1221, %v1334
    %v1348 = vmul.f32 %v1222, %v1334
    %v1349 = vmul.f32 %v1223, %v1334
    %v1350 = vmul.f32 %v1224, %v1334
    %1351 = vst.msk [vmem:[%s1] sm:$0xff] %vm49, %v1335
    %1352 = vst.msk [vmem:[%s1 + $0x8] sm:$0xff] %vm49, %v1336
    %1353 = vst.msk [vmem:[%s1 + $0x10] sm:$0xff] %vm49, %v1337
    %1354 = vst.msk [vmem:[%s1 + $0x18] sm:$0xff] %vm49, %v1338
    %1355 = vst.msk [vmem:[%s1 + $0x20] sm:$0xff] %vm49, %v1339
    %1356 = vst.msk [vmem:[%s1 + $0x28] sm:$0xff] %vm49, %v1340
    %1357 = vst.msk [vmem:[%s1 + $0x30] sm:$0xff] %vm49, %v1341
    %1358 = vst.msk [vmem:[%s1 + $0x38] sm:$0xff] %vm49, %v1342
    %1359 = vst.msk [vmem:[%s1 + $0x40] sm:$0xff] %vm49, %v1343
    %1360 = vst.msk [vmem:[%s1 + $0x48] sm:$0xff] %vm49, %v1344
    %1361 = vst.msk [vmem:[%s1 + $0x50] sm:$0xff] %vm49, %v1345
    %1362 = vst.msk [vmem:[%s1 + $0x58] sm:$0xff] %vm49, %v1346
    %1363 = vst.msk [vmem:[%s1 + $0x60] sm:$0xff] %vm49, %v1347
    %1364 = vst.msk [vmem:[%s1 + $0x68] sm:$0xff] %vm49, %v1348
    %1365 = vst.msk [vmem:[%s1 + $0x70] sm:$0xff] %vm49, %v1349
    %1366 = vst.msk [vmem:[%s1 + $0x78] sm:$0xff] %vm49, %v1350
    // Predicated region
    $region10: #{handcrafted_pod_extractor.1} parent=1 // pred_check
      _
    $region11: #{handcrafted_pod_extractor.1} parent=1 // pred_check_branch
      %1368 = sbr.rel (0) target = $region13
    $region12: #{handcrafted_pod_extractor.1} parent=1 // pred_region
      _
    $region13: #{handcrafted_pod_extractor.1} parent=1 // pred_fallthru
      _
    // Predicated region
    $region14: #{handcrafted_pod_extractor.1} parent=1 // pred_check
      _
    $region15: #{handcrafted_pod_extractor.1} parent=1 // pred_check_branch
      %1370 = sbr.rel (0) target = $region17
    $region16: #{handcrafted_pod_extractor.1} parent=1 // pred_region
      _
    $region17: #{handcrafted_pod_extractor.1} parent=1 // pred_fallthru
      _
    %1371 = vsyncpa [#allocation3], 1

</llo_original>
